<compile_context>
chip_gen: v5e
topology: v5e:2x2
jax: 0.10.0
libtpu: 0.0.40
codegen_flags: <defaults>
</compile_context>

<pallas_src>
import functools
import math

import jax
import jax.numpy as jnp
from jax import lax
from jax.experimental import pallas as pl
from jax.experimental.pallas import tpu as pltpu

EPS = 1e-5          # nn.LayerNorm default
NEG_SLOPE = 0.01    # nn.LeakyReLU default
MASK_FILL = -100000000.0


# ----------------------------------------------------------------------------- kernel

def _encoder_kernel(*refs, n_layer, n_head, has_mask, norm_factor):
    if has_mask:
        (x_ref, mask_ref,
         w0_ref, b0_ref, g1_ref, bb1_ref,
         wq_ref, wk_ref, wv_ref, wo_ref,
         g2_ref, bb2_ref, w1_ref, b1_ref, w2_ref, b2_ref,
         o_ref) = refs
    else:
        (x_ref,
         w0_ref, b0_ref, g1_ref, bb1_ref,
         wq_ref, wk_ref, wv_ref, wo_ref,
         g2_ref, bb2_ref, w1_ref, b1_ref, w2_ref, b2_ref,
         o_ref) = refs
        mask_ref = None

    f32 = jnp.float32
    x = x_ref[0].astype(f32)                                     # (N, Din)
    mask = mask_ref[0].astype(f32) if has_mask else None         # (N, N)

    def layer_norm(z, g, b):
        mu = jnp.mean(z, axis=-1, keepdims=True)
        c = z - mu
        var = jnp.mean(c * c, axis=-1, keepdims=True)            # biased, like torch
        return c * lax.rsqrt(var + EPS) * g + b

    # init projection: Linear(input_dim -> embedding_dim)
    h = jnp.dot(x, w0_ref[...].astype(f32), preferred_element_type=f32) \
        + b0_ref[...].astype(f32)                                # (N, D)

    for l in range(n_layer):
        h0 = h
        hn = layer_norm(h, g1_ref[l].astype(f32), bb1_ref[l].astype(f32))

        # ---- multi-head attention (heads unrolled, all matmuls on the MXU) ----
        attn = None
        for hd in range(n_head):
            i = l * n_head + hd
            q_h = jnp.dot(hn, wq_ref[i].astype(f32), preferred_element_type=f32)  # (N, Kd)
            k_h = jnp.dot(hn, wk_ref[i].astype(f32), preferred_element_type=f32)  # (N, Kd)
            v_h = jnp.dot(hn, wv_ref[i].astype(f32), preferred_element_type=f32)  # (N, Vd)

            s = norm_factor * lax.dot_general(                                     # (N, N)
                q_h, k_h, (((1,), (1,)), ((), ())), preferred_element_type=f32)
            if has_mask:
                s = jnp.where(mask == 0.0, MASK_FILL, s)          # torch masked_fill

            s = s - jnp.max(s, axis=-1, keepdims=True)
            p = jnp.exp(s)
            p = p / jnp.sum(p, axis=-1, keepdims=True)            # softmax

            head = jnp.dot(p, v_h, preferred_element_type=f32)                    # (N, Vd)
            contrib = jnp.dot(head, wo_ref[i].astype(f32),
                              preferred_element_type=f32)                         # (N, D)
            attn = contrib if attn is None else attn + contrib

        h1 = attn + h0

        # ---- MLP block ----
        hn2 = layer_norm(h1, g2_ref[l].astype(f32), bb2_ref[l].astype(f32))
        m = jnp.dot(hn2, w1_ref[l].astype(f32), preferred_element_type=f32) \
            + b1_ref[l].astype(f32)                               # (N, 512)
        m = jnp.where(m > 0, m, NEG_SLOPE * m)                    # LeakyReLU
        m = jnp.dot(m, w2_ref[l].astype(f32), preferred_element_type=f32) \
            + b2_ref[l].astype(f32)                               # (N, D)
        h = m + h1

    o_ref[0] = h.astype(o_ref.dtype)


# ----------------------------------------------------------------------------- wrapper

def _resident_spec(arr):
    ndim = arr.ndim
    return pl.BlockSpec(arr.shape, lambda b, _n=ndim: (0,) * _n)


def _combine_masks(key_padding_mask, attn_mask, n_batch, n_query):
    """Replicates the torch mask combination: mask = attn_mask + key_padding_mask,
    with masked positions being those where the combined mask == 0."""
    mask = None
    if attn_mask is not None:
        mask = attn_mask.reshape(n_batch, n_query, -1).astype(jnp.float32)
    if key_padding_mask is not None:
        kpm = key_padding_mask.reshape(n_batch, 1, -1).astype(jnp.float32)
        kpm = jnp.broadcast_to(kpm, (n_batch, n_query, kpm.shape[-1]))
        mask = kpm if mask is None else mask + kpm
    return mask


@functools.partial(jax.jit, static_argnames=("n_head", "n_layer"))
def encoder_mha_forward(q, params, key_padding_mask=None, attn_mask=None, *,
                        n_head=2, n_layer=1):
    """q: (B, N, input_dim) -> (B, N, embedding_dim)."""
    B, N, Din = q.shape
    D = params["w_init"].shape[-1]
    key_dim = params["w_query"].shape[-1]

    mask = _combine_masks(key_padding_mask, attn_mask, B, N)
    has_mask = mask is not None

    weight_names = ("w_init", "b_init", "gamma1", "beta1",
                    "w_query", "w_key", "w_value", "w_out",
                    "gamma2", "beta2", "w_mlp1", "b_mlp1", "w_mlp2", "b_mlp2")
    weights = [params[k] for k in weight_names]

    inputs = [q] + ([mask] if has_mask else []) + weights

    in_specs = [pl.BlockSpec((1, N, Din), lambda b: (b, 0, 0))]
    if has_mask:
        in_specs.append(pl.BlockSpec((1, N, N), lambda b: (b, 0, 0)))
    in_specs += [_resident_spec(w) for w in weights]

    kernel = functools.partial(
        _encoder_kernel,
        n_layer=n_layer, n_head=n_head, has_mask=has_mask,
        norm_factor=1.0 / math.sqrt(key_dim))

    return pl.pallas_call(
        kernel,
        out_shape=jax.ShapeDtypeStruct((B, N, D), q.dtype),
        grid_spec=pltpu.PrefetchScalarGridSpec(
            num_scalar_prefetch=0,
            grid=(B,),
            in_specs=in_specs,
            out_specs=pl.BlockSpec((1, N, D), lambda b: (b, 0, 0)),
        ),
        compiler_params=pltpu.CompilerParams(
            dimension_semantics=("parallel",),          # v7x: shard batches across TCs
            vmem_limit_bytes=48 * 1024 * 1024,          # > 16/32 MiB scoped defaults, < v7x 64 MiB
        ),
    )(*inputs)


# ----------------------------------------------------------------------------- params + reference

def init_params(key, input_dim, embedding_dim, n_head, n_layer, mlp_hidden=512,
                dtype=jnp.float32):
    kd = embedding_dim // n_head
    L, H, D = n_layer, n_head, embedding_dim

    def u(k, shape, fan):
        s = 1.0 / math.sqrt(fan)
        return jax.random.uniform(k, shape, dtype=dtype, minval=-s, maxval=s)

    ks = jax.random.split(key, 10)
    return {
        "w_init": u(ks[0], (input_dim, D), input_dim),
        "b_init": u(ks[1], (1, D), input_dim),
        "gamma1": jnp.ones((L, 1, D), dtype),
        "beta1": jnp.zeros((L, 1, D), dtype),
        "w_query": u(ks[2], (L * H, D, kd), kd),
        "w_key": u(ks[3], (L * H, D, kd), kd),
        "w_value": u(ks[4], (L * H, D, kd), kd),
        "w_out": u(ks[5], (L * H, kd, D), D),
        "gamma2": jnp.ones((L, 1, D), dtype),
        "beta2": jnp.zeros((L, 1, D), dtype),
        "w_mlp1": u(ks[6], (L, D, mlp_hidden), D),
        "b_mlp1": u(ks[7], (L, 1, mlp_hidden), D),
        "w_mlp2": u(ks[8], (L, mlp_hidden, D), mlp_hidden),
        "b_mlp2": u(ks[9], (L, 1, D), mlp_hidden),
    }


def ref_forward(q, params, key_padding_mask=None, attn_mask=None, *, n_head=2, n_layer=1):
    """Pure-JAX reference mirroring the PyTorch forward."""
    B, N, _ = q.shape
    kd = params["w_query"].shape[-1]
    norm = 1.0 / math.sqrt(kd)
    mask = _combine_masks(key_padding_mask, attn_mask, B, N)

    def ln(z, g, b):
        mu = jnp.mean(z, -1, keepdims=True)
        c = z - mu
        var = jnp.mean(c * c, -1, keepdims=True)
        return c / jnp.sqrt(var + EPS) * g + b

    h = q @ params["w_init"] + params["b_init"][0]
    for l in range(n_layer):
        h0 = h
        hn = ln(h, params["gamma1"][l, 0], params["beta1"][l, 0])
        attn = 0.0
        for hd in range(n_head):
            i = l * n_head + hd
            Q = hn @ params["w_query"][i]
            K = hn @ params["w_key"][i]
            V = hn @ params["w_value"][i]
            s = norm * jnp.einsum("bqd,bkd->bqk", Q, K)
            if mask is not None:
                s = jnp.where(mask == 0.0, MASK_FILL, s)
            p = jax.nn.softmax(s, axis=-1)
            attn = attn + (p @ V) @ params["w_out"][i]
        h1 = attn + h0
        hn2 = ln(h1, params["gamma2"][l, 0], params["beta2"][l, 0])
        m = hn2 @ params["w_mlp1"][l] + params["b_mlp1"][l, 0]
        m = jnp.where(m > 0, m, NEG_SLOPE * m)
        m = m @ params["w_mlp2"][l] + params["b_mlp2"][l, 0]
        h = m + h1
    return h


# ----------------------------------------------------------------------------- main

if __name__ == "__main__":
    # Small shapes consistent with the module defaults:
    # Batch=2, Num_Query=8, input_dim=4, embedding_dim=32, n_head=2, n_layer=1
    B, N = 2, 8
    input_dim, embedding_dim, n_head, n_layer = 4, 32, 2, 1

    key = jax.random.PRNGKey(0)
    kx, kp, km1, km2 = jax.random.split(key, 4)
    x = jax.random.normal(kx, (B, N, input_dim), dtype=jnp.float32)
    params = init_params(kp, input_dim, embedding_dim, n_head, n_layer)

    # --- no-mask path ---
    out = jax.block_until_ready(
        encoder_mha_forward(x, params, n_head=n_head, n_layer=n_layer))
    ref = ref_forward(x, params, n_head=n_head, n_layer=n_layer)
    assert out.shape == (B, N, embedding_dim) and out.dtype == x.dtype
    assert jnp.max(jnp.abs(out - ref)) < 2e-4

    # --- masked path (node padding mask + edge mask, 0 == masked out) ---
    key_padding_mask = (jax.random.uniform(km1, (B, 1, N)) > 0.2).astype(jnp.float32)
    key_padding_mask = key_padding_mask.at[:, :, 0].set(1.0)   # keep >=1 valid key per batch
    attn_mask = (jax.random.uniform(km2, (B, N, N)) > 0.3).astype(jnp.float32)

    out_m = jax.block_until_ready(
        encoder_mha_forward(x, params, key_padding_mask=key_padding_mask,
                            attn_mask=attn_mask, n_head=n_head, n_layer=n_layer))
    ref_m = ref_forward(x, params, key_padding_mask=key_padding_mask,
                        attn_mask=attn_mask, n_head=n_head, n_layer=n_layer)
    assert jnp.max(jnp.abs(out_m - ref_m)) < 2e-4

    print("KERNEL_OK")
</pallas_src>

<mosaic_0001>
module attributes {stable_mosaic.version = 11 : i64} {
  func.func @_encoder_kernel(%arg0: i32, %arg1: memref<1x8x4xf32, #tpu.memory_space<vmem>>, %arg2: memref<4x32xf32, #tpu.memory_space<vmem>>, %arg3: memref<1x32xf32, #tpu.memory_space<vmem>>, %arg4: memref<1x1x32xf32, #tpu.memory_space<vmem>>, %arg5: memref<1x1x32xf32, #tpu.memory_space<vmem>>, %arg6: memref<2x32x16xf32, #tpu.memory_space<vmem>>, %arg7: memref<2x32x16xf32, #tpu.memory_space<vmem>>, %arg8: memref<2x32x16xf32, #tpu.memory_space<vmem>>, %arg9: memref<2x16x32xf32, #tpu.memory_space<vmem>>, %arg10: memref<1x1x32xf32, #tpu.memory_space<vmem>>, %arg11: memref<1x1x32xf32, #tpu.memory_space<vmem>>, %arg12: memref<1x32x512xf32, #tpu.memory_space<vmem>>, %arg13: memref<1x1x512xf32, #tpu.memory_space<vmem>>, %arg14: memref<1x512x32xf32, #tpu.memory_space<vmem>>, %arg15: memref<1x1x32xf32, #tpu.memory_space<vmem>>, %arg16: memref<1x8x32xf32, #tpu.memory_space<vmem>>) attributes {dimension_semantics = [#tpu.dimension_semantics<parallel>], iteration_bounds = array<i64: 2>, scalar_prefetch = 0 : i64, scratch_operands = 0 : i64, tpu.core_type = #tpu.core_type<tc>, window_params = [{transform_indices = @transform_0, window_bounds = array<i64: 1, 8, 4>}, {pipeline_mode = #tpu.pipeline_mode<synchronous>, transform_indices = @transform_1, window_bounds = array<i64: 4, 32>}, {pipeline_mode = #tpu.pipeline_mode<synchronous>, transform_indices = @transform_2, window_bounds = array<i64: 1, 32>}, {pipeline_mode = #tpu.pipeline_mode<synchronous>, transform_indices = @transform_3, window_bounds = array<i64: 1, 1, 32>}, {pipeline_mode = #tpu.pipeline_mode<synchronous>, transform_indices = @transform_4, window_bounds = array<i64: 1, 1, 32>}, {pipeline_mode = #tpu.pipeline_mode<synchronous>, transform_indices = @transform_5, window_bounds = array<i64: 2, 32, 16>}, {pipeline_mode = #tpu.pipeline_mode<synchronous>, transform_indices = @transform_6, window_bounds = array<i64: 2, 32, 16>}, {pipeline_mode = #tpu.pipeline_mode<synchronous>, transform_indices = @transform_7, window_bounds = array<i64: 2, 32, 16>}, {pipeline_mode = #tpu.pipeline_mode<synchronous>, transform_indices = @transform_8, window_bounds = array<i64: 2, 16, 32>}, {pipeline_mode = #tpu.pipeline_mode<synchronous>, transform_indices = @transform_9, window_bounds = array<i64: 1, 1, 32>}, {pipeline_mode = #tpu.pipeline_mode<synchronous>, transform_indices = @transform_10, window_bounds = array<i64: 1, 1, 32>}, {pipeline_mode = #tpu.pipeline_mode<synchronous>, transform_indices = @transform_11, window_bounds = array<i64: 1, 32, 512>}, {pipeline_mode = #tpu.pipeline_mode<synchronous>, transform_indices = @transform_12, window_bounds = array<i64: 1, 1, 512>}, {pipeline_mode = #tpu.pipeline_mode<synchronous>, transform_indices = @transform_13, window_bounds = array<i64: 1, 512, 32>}, {pipeline_mode = #tpu.pipeline_mode<synchronous>, transform_indices = @transform_14, window_bounds = array<i64: 1, 1, 32>}, {transform_indices = @transform_15, window_bounds = array<i64: 1, 8, 32>}]} {
    %c0 = arith.constant 0 : index
    %c0_0 = arith.constant 0 : index
    %c0_1 = arith.constant 0 : index
    %0 = vector.load %arg1[%c0, %c0_0, %c0_1] : memref<1x8x4xf32, #tpu.memory_space<vmem>>, vector<1x8x4xf32>
    %1 = vector.shape_cast %0 : vector<1x8x4xf32> to vector<8x4xf32>
    %c0_2 = arith.constant 0 : index
    %c0_3 = arith.constant 0 : index
    %2 = vector.load %arg2[%c0_2, %c0_3] : memref<4x32xf32, #tpu.memory_space<vmem>>, vector<4x32xf32>
    %cst = arith.constant dense<0.000000e+00> : vector<8x32xf32>
    %3 = tpu.matmul %1, %2, %cst {dimension_numbers = #tpu.dot_dimension_numbers<[1], [0], [0], [1], [0, 0, 1, 1], [], []>} : vector<8x4xf32>, vector<4x32xf32>, vector<8x32xf32> -> vector<8x32xf32>
    %c0_4 = arith.constant 0 : index
    %c0_5 = arith.constant 0 : index
    %4 = vector.load %arg3[%c0_4, %c0_5] : memref<1x32xf32, #tpu.memory_space<vmem>>, vector<1x32xf32>
    %5 = vector.broadcast %4 : vector<1x32xf32> to vector<8x32xf32>
    %6 = arith.addf %3, %5 : vector<8x32xf32>
    %c0_6 = arith.constant 0 : index
    %c0_7 = arith.constant 0 : index
    %c0_8 = arith.constant 0 : index
    %7 = vector.load %arg4[%c0_6, %c0_7, %c0_8] : memref<1x1x32xf32, #tpu.memory_space<vmem>>, vector<1x1x32xf32>
    %8 = vector.shape_cast %7 : vector<1x1x32xf32> to vector<1x32xf32>
    %c0_9 = arith.constant 0 : index
    %c0_10 = arith.constant 0 : index
    %c0_11 = arith.constant 0 : index
    %9 = vector.load %arg5[%c0_9, %c0_10, %c0_11] : memref<1x1x32xf32, #tpu.memory_space<vmem>>, vector<1x1x32xf32>
    %10 = vector.shape_cast %9 : vector<1x1x32xf32> to vector<1x32xf32>
    %cst_12 = arith.constant dense<0.000000e+00> : vector<8xf32>
    %11 = vector.multi_reduction <add>, %6, %cst_12 [1] : vector<8x32xf32> to vector<8xf32>
    %12 = vector.shape_cast %11 : vector<8xf32> to vector<8x1xf32>
    %cst_13 = arith.constant 3.200000e+01 : f32
    %13 = vector.broadcast %cst_13 : f32 to vector<8x1xf32>
    %14 = arith.divf %12, %13 : vector<8x1xf32>
    %15 = vector.broadcast %14 : vector<8x1xf32> to vector<8x32xf32>
    %16 = arith.subf %6, %15 : vector<8x32xf32>
    %17 = arith.mulf %16, %16 : vector<8x32xf32>
    %cst_14 = arith.constant dense<0.000000e+00> : vector<8xf32>
    %18 = vector.multi_reduction <add>, %17, %cst_14 [1] : vector<8x32xf32> to vector<8xf32>
    %19 = vector.shape_cast %18 : vector<8xf32> to vector<8x1xf32>
    %cst_15 = arith.constant 3.200000e+01 : f32
    %20 = vector.broadcast %cst_15 : f32 to vector<8x1xf32>
    %21 = arith.divf %19, %20 : vector<8x1xf32>
    %cst_16 = arith.constant 9.99999974E-6 : f32
    %22 = vector.broadcast %cst_16 : f32 to vector<8x1xf32>
    %23 = arith.addf %21, %22 : vector<8x1xf32>
    %24 = math.rsqrt %23 : vector<8x1xf32>
    %25 = vector.broadcast %24 : vector<8x1xf32> to vector<8x32xf32>
    %26 = arith.mulf %16, %25 : vector<8x32xf32>
    %27 = vector.broadcast %8 : vector<1x32xf32> to vector<8x32xf32>
    %28 = arith.mulf %26, %27 : vector<8x32xf32>
    %29 = vector.broadcast %10 : vector<1x32xf32> to vector<8x32xf32>
    %30 = arith.addf %28, %29 : vector<8x32xf32>
    %c0_17 = arith.constant 0 : index
    %c0_18 = arith.constant 0 : index
    %c0_19 = arith.constant 0 : index
    %31 = vector.load %arg6[%c0_17, %c0_18, %c0_19] : memref<2x32x16xf32, #tpu.memory_space<vmem>>, vector<1x32x16xf32>
    %32 = vector.shape_cast %31 : vector<1x32x16xf32> to vector<32x16xf32>
    %cst_20 = arith.constant dense<0.000000e+00> : vector<8x16xf32>
    %33 = tpu.matmul %30, %32, %cst_20 {dimension_numbers = #tpu.dot_dimension_numbers<[1], [0], [0], [1], [0, 0, 1, 1], [], []>} : vector<8x32xf32>, vector<32x16xf32>, vector<8x16xf32> -> vector<8x16xf32>
    %c0_21 = arith.constant 0 : index
    %c0_22 = arith.constant 0 : index
    %c0_23 = arith.constant 0 : index
    %34 = vector.load %arg7[%c0_21, %c0_22, %c0_23] : memref<2x32x16xf32, #tpu.memory_space<vmem>>, vector<1x32x16xf32>
    %35 = vector.shape_cast %34 : vector<1x32x16xf32> to vector<32x16xf32>
    %cst_24 = arith.constant dense<0.000000e+00> : vector<8x16xf32>
    %36 = tpu.matmul %30, %35, %cst_24 {dimension_numbers = #tpu.dot_dimension_numbers<[1], [0], [0], [1], [0, 0, 1, 1], [], []>} : vector<8x32xf32>, vector<32x16xf32>, vector<8x16xf32> -> vector<8x16xf32>
    %c0_25 = arith.constant 0 : index
    %c0_26 = arith.constant 0 : index
    %c0_27 = arith.constant 0 : index
    %37 = vector.load %arg8[%c0_25, %c0_26, %c0_27] : memref<2x32x16xf32, #tpu.memory_space<vmem>>, vector<1x32x16xf32>
    %38 = vector.shape_cast %37 : vector<1x32x16xf32> to vector<32x16xf32>
    %cst_28 = arith.constant dense<0.000000e+00> : vector<8x16xf32>
    %39 = tpu.matmul %30, %38, %cst_28 {dimension_numbers = #tpu.dot_dimension_numbers<[1], [0], [0], [1], [0, 0, 1, 1], [], []>} : vector<8x32xf32>, vector<32x16xf32>, vector<8x16xf32> -> vector<8x16xf32>
    %cst_29 = arith.constant dense<0.000000e+00> : vector<8x8xf32>
    %40 = tpu.matmul %33, %36, %cst_29 {dimension_numbers = #tpu.dot_dimension_numbers<[1], [1], [0], [0], [0, 0, 1, 0], [], []>} : vector<8x16xf32>, vector<8x16xf32>, vector<8x8xf32> -> vector<8x8xf32>
    %cst_30 = arith.constant 2.500000e-01 : f32
    %41 = vector.broadcast %cst_30 : f32 to vector<8x8xf32>
    %42 = arith.mulf %41, %40 : vector<8x8xf32>
    %cst_31 = arith.constant dense<0xFF800000> : vector<8xf32>
    %43 = vector.multi_reduction <maximumf>, %42, %cst_31 [1] : vector<8x8xf32> to vector<8xf32>
    %44 = vector.shape_cast %43 : vector<8xf32> to vector<8x1xf32>
    %45 = vector.broadcast %44 : vector<8x1xf32> to vector<8x8xf32>
    %46 = arith.subf %42, %45 : vector<8x8xf32>
    %47 = math.exp %46 : vector<8x8xf32>
    %cst_32 = arith.constant dense<0.000000e+00> : vector<8xf32>
    %48 = vector.multi_reduction <add>, %47, %cst_32 [1] : vector<8x8xf32> to vector<8xf32>
    %49 = vector.shape_cast %48 : vector<8xf32> to vector<8x1xf32>
    %50 = vector.broadcast %49 : vector<8x1xf32> to vector<8x8xf32>
    %51 = arith.divf %47, %50 : vector<8x8xf32>
    %cst_33 = arith.constant dense<0.000000e+00> : vector<8x16xf32>
    %52 = tpu.matmul %51, %39, %cst_33 {dimension_numbers = #tpu.dot_dimension_numbers<[1], [0], [0], [1], [0, 0, 1, 1], [], []>} : vector<8x8xf32>, vector<8x16xf32>, vector<8x16xf32> -> vector<8x16xf32>
    %c0_34 = arith.constant 0 : index
    %c0_35 = arith.constant 0 : index
    %c0_36 = arith.constant 0 : index
    %53 = vector.load %arg9[%c0_34, %c0_35, %c0_36] : memref<2x16x32xf32, #tpu.memory_space<vmem>>, vector<1x16x32xf32>
    %54 = vector.shape_cast %53 : vector<1x16x32xf32> to vector<16x32xf32>
    %cst_37 = arith.constant dense<0.000000e+00> : vector<8x32xf32>
    %55 = tpu.matmul %52, %54, %cst_37 {dimension_numbers = #tpu.dot_dimension_numbers<[1], [0], [0], [1], [0, 0, 1, 1], [], []>} : vector<8x16xf32>, vector<16x32xf32>, vector<8x32xf32> -> vector<8x32xf32>
    %c1 = arith.constant 1 : index
    %c0_38 = arith.constant 0 : index
    %c0_39 = arith.constant 0 : index
    %56 = vector.load %arg6[%c1, %c0_38, %c0_39] : memref<2x32x16xf32, #tpu.memory_space<vmem>>, vector<1x32x16xf32>
    %57 = vector.shape_cast %56 : vector<1x32x16xf32> to vector<32x16xf32>
    %cst_40 = arith.constant dense<0.000000e+00> : vector<8x16xf32>
    %58 = tpu.matmul %30, %57, %cst_40 {dimension_numbers = #tpu.dot_dimension_numbers<[1], [0], [0], [1], [0, 0, 1, 1], [], []>} : vector<8x32xf32>, vector<32x16xf32>, vector<8x16xf32> -> vector<8x16xf32>
    %c1_41 = arith.constant 1 : index
    %c0_42 = arith.constant 0 : index
    %c0_43 = arith.constant 0 : index
    %59 = vector.load %arg7[%c1_41, %c0_42, %c0_43] : memref<2x32x16xf32, #tpu.memory_space<vmem>>, vector<1x32x16xf32>
    %60 = vector.shape_cast %59 : vector<1x32x16xf32> to vector<32x16xf32>
    %cst_44 = arith.constant dense<0.000000e+00> : vector<8x16xf32>
    %61 = tpu.matmul %30, %60, %cst_44 {dimension_numbers = #tpu.dot_dimension_numbers<[1], [0], [0], [1], [0, 0, 1, 1], [], []>} : vector<8x32xf32>, vector<32x16xf32>, vector<8x16xf32> -> vector<8x16xf32>
    %c1_45 = arith.constant 1 : index
    %c0_46 = arith.constant 0 : index
    %c0_47 = arith.constant 0 : index
    %62 = vector.load %arg8[%c1_45, %c0_46, %c0_47] : memref<2x32x16xf32, #tpu.memory_space<vmem>>, vector<1x32x16xf32>
    %63 = vector.shape_cast %62 : vector<1x32x16xf32> to vector<32x16xf32>
    %cst_48 = arith.constant dense<0.000000e+00> : vector<8x16xf32>
    %64 = tpu.matmul %30, %63, %cst_48 {dimension_numbers = #tpu.dot_dimension_numbers<[1], [0], [0], [1], [0, 0, 1, 1], [], []>} : vector<8x32xf32>, vector<32x16xf32>, vector<8x16xf32> -> vector<8x16xf32>
    %cst_49 = arith.constant dense<0.000000e+00> : vector<8x8xf32>
    %65 = tpu.matmul %58, %61, %cst_49 {dimension_numbers = #tpu.dot_dimension_numbers<[1], [1], [0], [0], [0, 0, 1, 0], [], []>} : vector<8x16xf32>, vector<8x16xf32>, vector<8x8xf32> -> vector<8x8xf32>
    %cst_50 = arith.constant 2.500000e-01 : f32
    %66 = vector.broadcast %cst_50 : f32 to vector<8x8xf32>
    %67 = arith.mulf %66, %65 : vector<8x8xf32>
    %cst_51 = arith.constant dense<0xFF800000> : vector<8xf32>
    %68 = vector.multi_reduction <maximumf>, %67, %cst_51 [1] : vector<8x8xf32> to vector<8xf32>
    %69 = vector.shape_cast %68 : vector<8xf32> to vector<8x1xf32>
    %70 = vector.broadcast %69 : vector<8x1xf32> to vector<8x8xf32>
    %71 = arith.subf %67, %70 : vector<8x8xf32>
    %72 = math.exp %71 : vector<8x8xf32>
    %cst_52 = arith.constant dense<0.000000e+00> : vector<8xf32>
    %73 = vector.multi_reduction <add>, %72, %cst_52 [1] : vector<8x8xf32> to vector<8xf32>
    %74 = vector.shape_cast %73 : vector<8xf32> to vector<8x1xf32>
    %75 = vector.broadcast %74 : vector<8x1xf32> to vector<8x8xf32>
    %76 = arith.divf %72, %75 : vector<8x8xf32>
    %cst_53 = arith.constant dense<0.000000e+00> : vector<8x16xf32>
    %77 = tpu.matmul %76, %64, %cst_53 {dimension_numbers = #tpu.dot_dimension_numbers<[1], [0], [0], [1], [0, 0, 1, 1], [], []>} : vector<8x8xf32>, vector<8x16xf32>, vector<8x16xf32> -> vector<8x16xf32>
    %c1_54 = arith.constant 1 : index
    %c0_55 = arith.constant 0 : index
    %c0_56 = arith.constant 0 : index
    %78 = vector.load %arg9[%c1_54, %c0_55, %c0_56] : memref<2x16x32xf32, #tpu.memory_space<vmem>>, vector<1x16x32xf32>
    %79 = vector.shape_cast %78 : vector<1x16x32xf32> to vector<16x32xf32>
    %cst_57 = arith.constant dense<0.000000e+00> : vector<8x32xf32>
    %80 = tpu.matmul %77, %79, %cst_57 {dimension_numbers = #tpu.dot_dimension_numbers<[1], [0], [0], [1], [0, 0, 1, 1], [], []>} : vector<8x16xf32>, vector<16x32xf32>, vector<8x32xf32> -> vector<8x32xf32>
    %81 = arith.addf %55, %80 : vector<8x32xf32>
    %82 = arith.addf %81, %6 : vector<8x32xf32>
    %c0_58 = arith.constant 0 : index
    %c0_59 = arith.constant 0 : index
    %c0_60 = arith.constant 0 : index
    %83 = vector.load %arg10[%c0_58, %c0_59, %c0_60] : memref<1x1x32xf32, #tpu.memory_space<vmem>>, vector<1x1x32xf32>
    %84 = vector.shape_cast %83 : vector<1x1x32xf32> to vector<1x32xf32>
    %c0_61 = arith.constant 0 : index
    %c0_62 = arith.constant 0 : index
    %c0_63 = arith.constant 0 : index
    %85 = vector.load %arg11[%c0_61, %c0_62, %c0_63] : memref<1x1x32xf32, #tpu.memory_space<vmem>>, vector<1x1x32xf32>
    %86 = vector.shape_cast %85 : vector<1x1x32xf32> to vector<1x32xf32>
    %cst_64 = arith.constant dense<0.000000e+00> : vector<8xf32>
    %87 = vector.multi_reduction <add>, %82, %cst_64 [1] : vector<8x32xf32> to vector<8xf32>
    %88 = vector.shape_cast %87 : vector<8xf32> to vector<8x1xf32>
    %cst_65 = arith.constant 3.200000e+01 : f32
    %89 = vector.broadcast %cst_65 : f32 to vector<8x1xf32>
    %90 = arith.divf %88, %89 : vector<8x1xf32>
    %91 = vector.broadcast %90 : vector<8x1xf32> to vector<8x32xf32>
    %92 = arith.subf %82, %91 : vector<8x32xf32>
    %93 = arith.mulf %92, %92 : vector<8x32xf32>
    %cst_66 = arith.constant dense<0.000000e+00> : vector<8xf32>
    %94 = vector.multi_reduction <add>, %93, %cst_66 [1] : vector<8x32xf32> to vector<8xf32>
    %95 = vector.shape_cast %94 : vector<8xf32> to vector<8x1xf32>
    %cst_67 = arith.constant 3.200000e+01 : f32
    %96 = vector.broadcast %cst_67 : f32 to vector<8x1xf32>
    %97 = arith.divf %95, %96 : vector<8x1xf32>
    %cst_68 = arith.constant 9.99999974E-6 : f32
    %98 = vector.broadcast %cst_68 : f32 to vector<8x1xf32>
    %99 = arith.addf %97, %98 : vector<8x1xf32>
    %100 = math.rsqrt %99 : vector<8x1xf32>
    %101 = vector.broadcast %100 : vector<8x1xf32> to vector<8x32xf32>
    %102 = arith.mulf %92, %101 : vector<8x32xf32>
    %103 = vector.broadcast %84 : vector<1x32xf32> to vector<8x32xf32>
    %104 = arith.mulf %102, %103 : vector<8x32xf32>
    %105 = vector.broadcast %86 : vector<1x32xf32> to vector<8x32xf32>
    %106 = arith.addf %104, %105 : vector<8x32xf32>
    %c0_69 = arith.constant 0 : index
    %c0_70 = arith.constant 0 : index
    %c0_71 = arith.constant 0 : index
    %107 = vector.load %arg12[%c0_69, %c0_70, %c0_71] : memref<1x32x512xf32, #tpu.memory_space<vmem>>, vector<1x32x512xf32>
    %108 = vector.shape_cast %107 : vector<1x32x512xf32> to vector<32x512xf32>
    %cst_72 = arith.constant dense<0.000000e+00> : vector<8x512xf32>
    %109 = tpu.matmul %106, %108, %cst_72 {dimension_numbers = #tpu.dot_dimension_numbers<[1], [0], [0], [1], [0, 0, 1, 1], [], []>} : vector<8x32xf32>, vector<32x512xf32>, vector<8x512xf32> -> vector<8x512xf32>
    %c0_73 = arith.constant 0 : index
    %c0_74 = arith.constant 0 : index
    %c0_75 = arith.constant 0 : index
    %110 = vector.load %arg13[%c0_73, %c0_74, %c0_75] : memref<1x1x512xf32, #tpu.memory_space<vmem>>, vector<1x1x512xf32>
    %111 = vector.shape_cast %110 : vector<1x1x512xf32> to vector<1x512xf32>
    %112 = vector.broadcast %111 : vector<1x512xf32> to vector<8x512xf32>
    %113 = arith.addf %109, %112 : vector<8x512xf32>
    %cst_76 = arith.constant 0.000000e+00 : f32
    %114 = vector.broadcast %cst_76 : f32 to vector<8x512xf32>
    %115 = arith.cmpf ogt, %113, %114 : vector<8x512xf32>
    %cst_77 = arith.constant 0.00999999977 : f32
    %116 = vector.broadcast %cst_77 : f32 to vector<8x512xf32>
    %117 = arith.mulf %116, %113 : vector<8x512xf32>
    %118 = arith.select %115, %113, %117 : vector<8x512xi1>, vector<8x512xf32>
    %c0_78 = arith.constant 0 : index
    %c0_79 = arith.constant 0 : index
    %c0_80 = arith.constant 0 : index
    %119 = vector.load %arg14[%c0_78, %c0_79, %c0_80] : memref<1x512x32xf32, #tpu.memory_space<vmem>>, vector<1x512x32xf32>
    %120 = vector.shape_cast %119 : vector<1x512x32xf32> to vector<512x32xf32>
    %cst_81 = arith.constant dense<0.000000e+00> : vector<8x32xf32>
    %121 = tpu.matmul %118, %120, %cst_81 {dimension_numbers = #tpu.dot_dimension_numbers<[1], [0], [0], [1], [0, 0, 1, 1], [], []>} : vector<8x512xf32>, vector<512x32xf32>, vector<8x32xf32> -> vector<8x32xf32>
    %c0_82 = arith.constant 0 : index
    %c0_83 = arith.constant 0 : index
    %c0_84 = arith.constant 0 : index
    %122 = vector.load %arg15[%c0_82, %c0_83, %c0_84] : memref<1x1x32xf32, #tpu.memory_space<vmem>>, vector<1x1x32xf32>
    %123 = vector.shape_cast %122 : vector<1x1x32xf32> to vector<1x32xf32>
    %124 = vector.broadcast %123 : vector<1x32xf32> to vector<8x32xf32>
    %125 = arith.addf %121, %124 : vector<8x32xf32>
    %126 = arith.addf %125, %82 : vector<8x32xf32>
    %c0_85 = arith.constant 0 : index
    %c0_86 = arith.constant 0 : index
    %c0_87 = arith.constant 0 : index
    %127 = vector.load %arg16[%c0_85, %c0_86, %c0_87] : memref<1x8x32xf32, #tpu.memory_space<vmem>>, vector<1x8x32xf32>
    %128 = vector.shape_cast %127 : vector<1x8x32xf32> to vector<8x32xf32>
    %129 = vector.shape_cast %126 : vector<8x32xf32> to vector<1x8x32xf32>
    tpu.vector_store %arg16[%c0_85, %c0_86, %c0_87], %129 {strides = array<i32>} : memref<1x8x32xf32, #tpu.memory_space<vmem>>, vector<1x8x32xf32>,
    return
  }
  func.func @transform_0(%arg0: i32) -> (i32, i32, i32) {
    %c0_i32 = arith.constant 0 : i32
    %c0_i32_0 = arith.constant 0 : i32
    %c0_i32_1 = arith.constant 0 : i32
    return %arg0, %c0_i32, %c0_i32_0 : i32, i32, i32
  }
  func.func @transform_1(%arg0: i32) -> (i32, i32) {
    %c0_i32 = arith.constant 0 : i32
    %c0_i32_0 = arith.constant 0 : i32
    %c0_i32_1 = arith.constant 0 : i32
    return %c0_i32, %c0_i32_0 : i32, i32
  }
  func.func @transform_2(%arg0: i32) -> (i32, i32) {
    %c0_i32 = arith.constant 0 : i32
    %c0_i32_0 = arith.constant 0 : i32
    %c0_i32_1 = arith.constant 0 : i32
    return %c0_i32, %c0_i32_0 : i32, i32
  }
  func.func @transform_3(%arg0: i32) -> (i32, i32, i32) {
    %c0_i32 = arith.constant 0 : i32
    %c0_i32_0 = arith.constant 0 : i32
    %c0_i32_1 = arith.constant 0 : i32
    %c0_i32_2 = arith.constant 0 : i32
    return %c0_i32, %c0_i32_0, %c0_i32_1 : i32, i32, i32
  }
  func.func @transform_4(%arg0: i32) -> (i32, i32, i32) {
    %c0_i32 = arith.constant 0 : i32
    %c0_i32_0 = arith.constant 0 : i32
    %c0_i32_1 = arith.constant 0 : i32
    %c0_i32_2 = arith.constant 0 : i32
    return %c0_i32, %c0_i32_0, %c0_i32_1 : i32, i32, i32
  }
  func.func @transform_5(%arg0: i32) -> (i32, i32, i32) {
    %c0_i32 = arith.constant 0 : i32
    %c0_i32_0 = arith.constant 0 : i32
    %c0_i32_1 = arith.constant 0 : i32
    %c0_i32_2 = arith.constant 0 : i32
    return %c0_i32, %c0_i32_0, %c0_i32_1 : i32, i32, i32
  }
  func.func @transform_6(%arg0: i32) -> (i32, i32, i32) {
    %c0_i32 = arith.constant 0 : i32
    %c0_i32_0 = arith.constant 0 : i32
    %c0_i32_1 = arith.constant 0 : i32
    %c0_i32_2 = arith.constant 0 : i32
    return %c0_i32, %c0_i32_0, %c0_i32_1 : i32, i32, i32
  }
  func.func @transform_7(%arg0: i32) -> (i32, i32, i32) {
    %c0_i32 = arith.constant 0 : i32
    %c0_i32_0 = arith.constant 0 : i32
    %c0_i32_1 = arith.constant 0 : i32
    %c0_i32_2 = arith.constant 0 : i32
    return %c0_i32, %c0_i32_0, %c0_i32_1 : i32, i32, i32
  }
  func.func @transform_8(%arg0: i32) -> (i32, i32, i32) {
    %c0_i32 = arith.constant 0 : i32
    %c0_i32_0 = arith.constant 0 : i32
    %c0_i32_1 = arith.constant 0 : i32
    %c0_i32_2 = arith.constant 0 : i32
    return %c0_i32, %c0_i32_0, %c0_i32_1 : i32, i32, i32
  }
  func.func @transform_9(%arg0: i32) -> (i32, i32, i32) {
    %c0_i32 = arith.constant 0 : i32
    %c0_i32_0 = arith.constant 0 : i32
    %c0_i32_1 = arith.constant 0 : i32
    %c0_i32_2 = arith.constant 0 : i32
    return %c0_i32, %c0_i32_0, %c0_i32_1 : i32, i32, i32
  }
  func.func @transform_10(%arg0: i32) -> (i32, i32, i32) {
    %c0_i32 = arith.constant 0 : i32
    %c0_i32_0 = arith.constant 0 : i32
    %c0_i32_1 = arith.constant 0 : i32
    %c0_i32_2 = arith.constant 0 : i32
    return %c0_i32, %c0_i32_0, %c0_i32_1 : i32, i32, i32
  }
  func.func @transform_11(%arg0: i32) -> (i32, i32, i32) {
    %c0_i32 = arith.constant 0 : i32
    %c0_i32_0 = arith.constant 0 : i32
    %c0_i32_1 = arith.constant 0 : i32
    %c0_i32_2 = arith.constant 0 : i32
    return %c0_i32, %c0_i32_0, %c0_i32_1 : i32, i32, i32
  }
  func.func @transform_12(%arg0: i32) -> (i32, i32, i32) {
    %c0_i32 = arith.constant 0 : i32
    %c0_i32_0 = arith.constant 0 : i32
    %c0_i32_1 = arith.constant 0 : i32
    %c0_i32_2 = arith.constant 0 : i32
    return %c0_i32, %c0_i32_0, %c0_i32_1 : i32, i32, i32
  }
  func.func @transform_13(%arg0: i32) -> (i32, i32, i32) {
    %c0_i32 = arith.constant 0 : i32
    %c0_i32_0 = arith.constant 0 : i32
    %c0_i32_1 = arith.constant 0 : i32
    %c0_i32_2 = arith.constant 0 : i32
    return %c0_i32, %c0_i32_0, %c0_i32_1 : i32, i32, i32
  }
  func.func @transform_14(%arg0: i32) -> (i32, i32, i32) {
    %c0_i32 = arith.constant 0 : i32
    %c0_i32_0 = arith.constant 0 : i32
    %c0_i32_1 = arith.constant 0 : i32
    %c0_i32_2 = arith.constant 0 : i32
    return %c0_i32, %c0_i32_0, %c0_i32_1 : i32, i32, i32
  }
  func.func @transform_15(%arg0: i32) -> (i32, i32, i32) {
    %c0_i32 = arith.constant 0 : i32
    %c0_i32_0 = arith.constant 0 : i32
    %c0_i32_1 = arith.constant 0 : i32
    return %arg0, %c0_i32, %c0_i32_0 : i32, i32, i32
  }
}

</mosaic_0001>

<llo_original>
// kernel: encoder_mha_forward.1
$region0: #{encoder_mha_forward.1}
  #allocation0 [shape = 'u32[]', space=smem, size = 0x4, offset = 0x4, fixed_abs, tag = 'smem constant byte address 0x4 - core index']
  #allocation1 [shape = 'u32[72,128]{1,0:T(1,128)}', space=vmem, size = 0x9000, scoped, tag = 'internal scratch']
  %s0 = inlined_call_operand.vmem [shape: f32[2,8,4], index: 0, kind: input, shape index: {}]
  %s1 = inlined_call_operand.vmem [shape: f32[4,32], index: 1, kind: input, shape index: {}]
  %s2 = inlined_call_operand.vmem [shape: f32[1,32], index: 2, kind: input, shape index: {}]
  %s3 = inlined_call_operand.vmem [shape: f32[1,1,32], index: 3, kind: input, shape index: {}]
  %s4 = inlined_call_operand.vmem [shape: f32[1,1,32], index: 4, kind: input, shape index: {}]
  %s5 = inlined_call_operand.vmem [shape: f32[2,32,16], index: 5, kind: input, shape index: {}]
  %s6 = inlined_call_operand.vmem [shape: f32[2,32,16], index: 6, kind: input, shape index: {}]
  %s7 = inlined_call_operand.vmem [shape: f32[2,32,16], index: 7, kind: input, shape index: {}]
  %s8 = inlined_call_operand.vmem [shape: f32[2,16,32], index: 8, kind: input, shape index: {}]
  %s9 = inlined_call_operand.vmem [shape: f32[1,1,32], index: 9, kind: input, shape index: {}]
  %s10 = inlined_call_operand.vmem [shape: f32[1,1,32], index: 10, kind: input, shape index: {}]
  %s11 = inlined_call_operand.vmem [shape: f32[1,32,512], index: 11, kind: input, shape index: {}]
  %s12 = inlined_call_operand.vmem [shape: f32[1,1,512], index: 12, kind: input, shape index: {}]
  %s13 = inlined_call_operand.vmem [shape: f32[1,512,32], index: 13, kind: input, shape index: {}]
  %s14 = inlined_call_operand.vmem [shape: f32[1,1,32], index: 14, kind: input, shape index: {}]
  %s15 = inlined_call_operand.hbm [shape: f32[2,8,32], index: 15, kind: output, shape index: {}]
  %s16 = sld [smem:[#allocation0]]
  $region93: #{encoder_mha_forward.1} parent=0
    _
  %s18 = ssub.s32 1, %s16
  %s19 = scalar_select 0, %s18, %s16
  $region1: #{encoder_mha_forward.1} parent=0
    #allocation2 [shape = 'u8[8192]{0}', space=vmem, size = 0x2000, scoped, tag = 'output window, operand 0']
    #allocation3 [shape = 's32[2]{0}', space=sflag, size = 0x8, scoped, tag = 'scoped memory for encoder_mha_forward.1']
    %20 = vsyncpa [#allocation3], 0
    %s21 = scalar_lea.sflag [#allocation3], 1
    %22 = vsyncpa %s21, 0
    loop: start=0, step=1, limit=4
    $region2: #{encoder_mha_forward.1} parent=1 // loop_pre_header
      _
    $region3: #{encoder_mha_forward.1} parent=1 // loop_header
      %s24 = sphi 0, %s28
      %p25 = scmp.ge.s32.totalorder %s24, 4
      %s34 = sphi 0, %s36
      %s37 = sphi 0, %s34
      %s38 = sphi 0, %s37
      %s54 = sphi 0, %s38
      %s58 = sphi 0, %s58
      %s60 = sphi 0, %s58
      %s61 = sphi 0, %s60
      %s75 = sphi 0, %s61
      %s79 = sphi 0, %s79
      %s81 = sphi 0, %s79
      %s82 = sphi 0, %s81
      %s96 = sphi 0, %s82
      %s100 = sphi 0, %s100
      %s102 = sphi 0, %s100
      %s103 = sphi 0, %s102
      %s117 = sphi 0, %s103
      %s121 = sphi 0, %s121
      %s123 = sphi 0, %s121
      %s124 = sphi 0, %s123
      %s138 = sphi 0, %s124
      %s142 = sphi 0, %s142
      %s144 = sphi 0, %s142
      %s145 = sphi 0, %s144
      %s159 = sphi 0, %s145
      %s163 = sphi 0, %s163
      %s165 = sphi 0, %s163
      %s166 = sphi 0, %s165
      %s180 = sphi 0, %s166
      %s184 = sphi 0, %s184
      %s186 = sphi 0, %s184
      %s187 = sphi 0, %s186
      %s201 = sphi 0, %s187
      %s205 = sphi 0, %s205
      %s207 = sphi 0, %s205
      %s208 = sphi 0, %s207
      %s222 = sphi 0, %s208
      %s226 = sphi 0, %s226
      %s228 = sphi 0, %s226
      %s229 = sphi 0, %s228
      %s243 = sphi 0, %s229
      %s247 = sphi 0, %s247
      %s249 = sphi 0, %s247
      %s250 = sphi 0, %s249
      %s264 = sphi 0, %s250
      %s268 = sphi 0, %s268
      %s270 = sphi 0, %s268
      %s271 = sphi 0, %s270
      %s285 = sphi 0, %s271
      %s289 = sphi 0, %s289
      %s291 = sphi 0, %s289
      %s292 = sphi 0, %s291
      %s306 = sphi 0, %s292
      %s310 = sphi 0, %s310
      %s312 = sphi 0, %s310
      %s313 = sphi 0, %s312
      %s327 = sphi 0, %s313
      %s331 = sphi 0, %s331
      %s333 = sphi 0, %s331
      %s334 = sphi 0, %s333
      %s348 = sphi 0, %s334
      %s354 = sphi 0, %s356
      %s357 = sphi 0, %s354
      %s358 = sphi 0, %s357
      %s374 = sphi 0, %s358
    $region4: #{encoder_mha_forward.1} parent=1 // loop_header_branch
      %27 = sbr.rel (%p25) target = $region8
    $region5: #{encoder_mha_forward.1} parent=1 // loop_body
      %s29 = ssub.s32 %s24, 1
      %s30 = ssub.s32 %s24, 2
      %s31 = sadd.s32 %s24, 1
      %s32 = ssub.s32 %s24, %s31
      %p33 = scmp.eq.s32.totalorder %s32, 0
      %s35 = sadd.s32 %s34, 1
      %s36 = scalar_select %p33, %s34, %s35
      %p39 = pneg %p33
      %p40 = scmp.eq.s32.totalorder %s24, 1
      %p41 = por %p39, %p40
      %p42 = scmp.ne.s32.totalorder %s34, %s37
      %p43 = scmp.eq.s32.totalorder %s24, 0
      %p44 = por %p42, %p43
      %p45 = scmp.ne.s32.totalorder %s34, %s37
      %p46 = scmp.eq.s32.totalorder %s29, 1
      %p47 = por %p45, %p46
      %p48 = scmp.ne.s32.totalorder %s37, %s38
      %p49 = scmp.eq.s32.totalorder %s29, 0
      %p50 = por %p48, %p49
      %p51 = scmp.ne.s32.totalorder %s37, %s38
      %p52 = scmp.eq.s32.totalorder %s30, 1
      %p53 = por %p51, %p52
      %p55 = scmp.ne.s32.totalorder %s38, %s54
      %p56 = scmp.eq.s32.totalorder %s30, 0
      %p57 = por %p55, %p56
      %s59 = sadd.s32 %s58, 1
      %p62 = scmp.eq.s32.totalorder %s24, 1
      %p63 = scmp.ne.s32.totalorder %s58, %s60
      %p64 = scmp.eq.s32.totalorder %s24, 0
      %p65 = por %p63, %p64
      %p66 = scmp.ne.s32.totalorder %s58, %s60
      %p67 = scmp.eq.s32.totalorder %s29, 1
      %p68 = por %p66, %p67
      %p69 = scmp.ne.s32.totalorder %s60, %s61
      %p70 = scmp.eq.s32.totalorder %s29, 0
      %p71 = por %p69, %p70
      %p72 = scmp.ne.s32.totalorder %s60, %s61
      %p73 = scmp.eq.s32.totalorder %s30, 1
      %p74 = por %p72, %p73
      %p76 = scmp.ne.s32.totalorder %s61, %s75
      %p77 = scmp.eq.s32.totalorder %s30, 0
      %p78 = por %p76, %p77
      %s80 = sadd.s32 %s79, 1
      %p83 = scmp.eq.s32.totalorder %s24, 1
      %p84 = scmp.ne.s32.totalorder %s79, %s81
      %p85 = scmp.eq.s32.totalorder %s24, 0
      %p86 = por %p84, %p85
      %p87 = scmp.ne.s32.totalorder %s79, %s81
      %p88 = scmp.eq.s32.totalorder %s29, 1
      %p89 = por %p87, %p88
      %p90 = scmp.ne.s32.totalorder %s81, %s82
      %p91 = scmp.eq.s32.totalorder %s29, 0
      %p92 = por %p90, %p91
      %p93 = scmp.ne.s32.totalorder %s81, %s82
      %p94 = scmp.eq.s32.totalorder %s30, 1
      %p95 = por %p93, %p94
      %p97 = scmp.ne.s32.totalorder %s82, %s96
      %p98 = scmp.eq.s32.totalorder %s30, 0
      %p99 = por %p97, %p98
      %s101 = sadd.s32 %s100, 1
      %p104 = scmp.eq.s32.totalorder %s24, 1
      %p105 = scmp.ne.s32.totalorder %s100, %s102
      %p106 = scmp.eq.s32.totalorder %s24, 0
      %p107 = por %p105, %p106
      %p108 = scmp.ne.s32.totalorder %s100, %s102
      %p109 = scmp.eq.s32.totalorder %s29, 1
      %p110 = por %p108, %p109
      %p111 = scmp.ne.s32.totalorder %s102, %s103
      %p112 = scmp.eq.s32.totalorder %s29, 0
      %p113 = por %p111, %p112
      %p114 = scmp.ne.s32.totalorder %s102, %s103
      %p115 = scmp.eq.s32.totalorder %s30, 1
      %p116 = por %p114, %p115
      %p118 = scmp.ne.s32.totalorder %s103, %s117
      %p119 = scmp.eq.s32.totalorder %s30, 0
      %p120 = por %p118, %p119
      %s122 = sadd.s32 %s121, 1
      %p125 = scmp.eq.s32.totalorder %s24, 1
      %p126 = scmp.ne.s32.totalorder %s121, %s123
      %p127 = scmp.eq.s32.totalorder %s24, 0
      %p128 = por %p126, %p127
      %p129 = scmp.ne.s32.totalorder %s121, %s123
      %p130 = scmp.eq.s32.totalorder %s29, 1
      %p131 = por %p129, %p130
      %p132 = scmp.ne.s32.totalorder %s123, %s124
      %p133 = scmp.eq.s32.totalorder %s29, 0
      %p134 = por %p132, %p133
      %p135 = scmp.ne.s32.totalorder %s123, %s124
      %p136 = scmp.eq.s32.totalorder %s30, 1
      %p137 = por %p135, %p136
      %p139 = scmp.ne.s32.totalorder %s124, %s138
      %p140 = scmp.eq.s32.totalorder %s30, 0
      %p141 = por %p139, %p140
      %s143 = sadd.s32 %s142, 1
      %p146 = scmp.eq.s32.totalorder %s24, 1
      %p147 = scmp.ne.s32.totalorder %s142, %s144
      %p148 = scmp.eq.s32.totalorder %s24, 0
      %p149 = por %p147, %p148
      %p150 = scmp.ne.s32.totalorder %s142, %s144
      %p151 = scmp.eq.s32.totalorder %s29, 1
      %p152 = por %p150, %p151
      %p153 = scmp.ne.s32.totalorder %s144, %s145
      %p154 = scmp.eq.s32.totalorder %s29, 0
      %p155 = por %p153, %p154
      %p156 = scmp.ne.s32.totalorder %s144, %s145
      %p157 = scmp.eq.s32.totalorder %s30, 1
      %p158 = por %p156, %p157
      %p160 = scmp.ne.s32.totalorder %s145, %s159
      %p161 = scmp.eq.s32.totalorder %s30, 0
      %p162 = por %p160, %p161
      %s164 = sadd.s32 %s163, 1
      %p167 = scmp.eq.s32.totalorder %s24, 1
      %p168 = scmp.ne.s32.totalorder %s163, %s165
      %p169 = scmp.eq.s32.totalorder %s24, 0
      %p170 = por %p168, %p169
      %p171 = scmp.ne.s32.totalorder %s163, %s165
      %p172 = scmp.eq.s32.totalorder %s29, 1
      %p173 = por %p171, %p172
      %p174 = scmp.ne.s32.totalorder %s165, %s166
      %p175 = scmp.eq.s32.totalorder %s29, 0
      %p176 = por %p174, %p175
      %p177 = scmp.ne.s32.totalorder %s165, %s166
      %p178 = scmp.eq.s32.totalorder %s30, 1
      %p179 = por %p177, %p178
      %p181 = scmp.ne.s32.totalorder %s166, %s180
      %p182 = scmp.eq.s32.totalorder %s30, 0
      %p183 = por %p181, %p182
      %s185 = sadd.s32 %s184, 1
      %p188 = scmp.eq.s32.totalorder %s24, 1
      %p189 = scmp.ne.s32.totalorder %s184, %s186
      %p190 = scmp.eq.s32.totalorder %s24, 0
      %p191 = por %p189, %p190
      %p192 = scmp.ne.s32.totalorder %s184, %s186
      %p193 = scmp.eq.s32.totalorder %s29, 1
      %p194 = por %p192, %p193
      %p195 = scmp.ne.s32.totalorder %s186, %s187
      %p196 = scmp.eq.s32.totalorder %s29, 0
      %p197 = por %p195, %p196
      %p198 = scmp.ne.s32.totalorder %s186, %s187
      %p199 = scmp.eq.s32.totalorder %s30, 1
      %p200 = por %p198, %p199
      %p202 = scmp.ne.s32.totalorder %s187, %s201
      %p203 = scmp.eq.s32.totalorder %s30, 0
      %p204 = por %p202, %p203
      %s206 = sadd.s32 %s205, 1
      %p209 = scmp.eq.s32.totalorder %s24, 1
      %p210 = scmp.ne.s32.totalorder %s205, %s207
      %p211 = scmp.eq.s32.totalorder %s24, 0
      %p212 = por %p210, %p211
      %p213 = scmp.ne.s32.totalorder %s205, %s207
      %p214 = scmp.eq.s32.totalorder %s29, 1
      %p215 = por %p213, %p214
      %p216 = scmp.ne.s32.totalorder %s207, %s208
      %p217 = scmp.eq.s32.totalorder %s29, 0
      %p218 = por %p216, %p217
      %p219 = scmp.ne.s32.totalorder %s207, %s208
      %p220 = scmp.eq.s32.totalorder %s30, 1
      %p221 = por %p219, %p220
      %p223 = scmp.ne.s32.totalorder %s208, %s222
      %p224 = scmp.eq.s32.totalorder %s30, 0
      %p225 = por %p223, %p224
      %s227 = sadd.s32 %s226, 1
      %p230 = scmp.eq.s32.totalorder %s24, 1
      %p231 = scmp.ne.s32.totalorder %s226, %s228
      %p232 = scmp.eq.s32.totalorder %s24, 0
      %p233 = por %p231, %p232
      %p234 = scmp.ne.s32.totalorder %s226, %s228
      %p235 = scmp.eq.s32.totalorder %s29, 1
      %p236 = por %p234, %p235
      %p237 = scmp.ne.s32.totalorder %s228, %s229
      %p238 = scmp.eq.s32.totalorder %s29, 0
      %p239 = por %p237, %p238
      %p240 = scmp.ne.s32.totalorder %s228, %s229
      %p241 = scmp.eq.s32.totalorder %s30, 1
      %p242 = por %p240, %p241
      %p244 = scmp.ne.s32.totalorder %s229, %s243
      %p245 = scmp.eq.s32.totalorder %s30, 0
      %p246 = por %p244, %p245
      %s248 = sadd.s32 %s247, 1
      %p251 = scmp.eq.s32.totalorder %s24, 1
      %p252 = scmp.ne.s32.totalorder %s247, %s249
      %p253 = scmp.eq.s32.totalorder %s24, 0
      %p254 = por %p252, %p253
      %p255 = scmp.ne.s32.totalorder %s247, %s249
      %p256 = scmp.eq.s32.totalorder %s29, 1
      %p257 = por %p255, %p256
      %p258 = scmp.ne.s32.totalorder %s249, %s250
      %p259 = scmp.eq.s32.totalorder %s29, 0
      %p260 = por %p258, %p259
      %p261 = scmp.ne.s32.totalorder %s249, %s250
      %p262 = scmp.eq.s32.totalorder %s30, 1
      %p263 = por %p261, %p262
      %p265 = scmp.ne.s32.totalorder %s250, %s264
      %p266 = scmp.eq.s32.totalorder %s30, 0
      %p267 = por %p265, %p266
      %s269 = sadd.s32 %s268, 1
      %p272 = scmp.eq.s32.totalorder %s24, 1
      %p273 = scmp.ne.s32.totalorder %s268, %s270
      %p274 = scmp.eq.s32.totalorder %s24, 0
      %p275 = por %p273, %p274
      %p276 = scmp.ne.s32.totalorder %s268, %s270
      %p277 = scmp.eq.s32.totalorder %s29, 1
      %p278 = por %p276, %p277
      %p279 = scmp.ne.s32.totalorder %s270, %s271
      %p280 = scmp.eq.s32.totalorder %s29, 0
      %p281 = por %p279, %p280
      %p282 = scmp.ne.s32.totalorder %s270, %s271
      %p283 = scmp.eq.s32.totalorder %s30, 1
      %p284 = por %p282, %p283
      %p286 = scmp.ne.s32.totalorder %s271, %s285
      %p287 = scmp.eq.s32.totalorder %s30, 0
      %p288 = por %p286, %p287
      %s290 = sadd.s32 %s289, 1
      %p293 = scmp.eq.s32.totalorder %s24, 1
      %p294 = scmp.ne.s32.totalorder %s289, %s291
      %p295 = scmp.eq.s32.totalorder %s24, 0
      %p296 = por %p294, %p295
      %p297 = scmp.ne.s32.totalorder %s289, %s291
      %p298 = scmp.eq.s32.totalorder %s29, 1
      %p299 = por %p297, %p298
      %p300 = scmp.ne.s32.totalorder %s291, %s292
      %p301 = scmp.eq.s32.totalorder %s29, 0
      %p302 = por %p300, %p301
      %p303 = scmp.ne.s32.totalorder %s291, %s292
      %p304 = scmp.eq.s32.totalorder %s30, 1
      %p305 = por %p303, %p304
      %p307 = scmp.ne.s32.totalorder %s292, %s306
      %p308 = scmp.eq.s32.totalorder %s30, 0
      %p309 = por %p307, %p308
      %s311 = sadd.s32 %s310, 1
      %p314 = scmp.eq.s32.totalorder %s24, 1
      %p315 = scmp.ne.s32.totalorder %s310, %s312
      %p316 = scmp.eq.s32.totalorder %s24, 0
      %p317 = por %p315, %p316
      %p318 = scmp.ne.s32.totalorder %s310, %s312
      %p319 = scmp.eq.s32.totalorder %s29, 1
      %p320 = por %p318, %p319
      %p321 = scmp.ne.s32.totalorder %s312, %s313
      %p322 = scmp.eq.s32.totalorder %s29, 0
      %p323 = por %p321, %p322
      %p324 = scmp.ne.s32.totalorder %s312, %s313
      %p325 = scmp.eq.s32.totalorder %s30, 1
      %p326 = por %p324, %p325
      %p328 = scmp.ne.s32.totalorder %s313, %s327
      %p329 = scmp.eq.s32.totalorder %s30, 0
      %p330 = por %p328, %p329
      %s332 = sadd.s32 %s331, 1
      %p335 = scmp.eq.s32.totalorder %s24, 1
      %p336 = scmp.ne.s32.totalorder %s331, %s333
      %p337 = scmp.eq.s32.totalorder %s24, 0
      %p338 = por %p336, %p337
      %p339 = scmp.ne.s32.totalorder %s331, %s333
      %p340 = scmp.eq.s32.totalorder %s29, 1
      %p341 = por %p339, %p340
      %p342 = scmp.ne.s32.totalorder %s333, %s334
      %p343 = scmp.eq.s32.totalorder %s29, 0
      %p344 = por %p342, %p343
      %p345 = scmp.ne.s32.totalorder %s333, %s334
      %p346 = scmp.eq.s32.totalorder %s30, 1
      %p347 = por %p345, %p346
      %p349 = scmp.ne.s32.totalorder %s334, %s348
      %p350 = scmp.eq.s32.totalorder %s30, 0
      %p351 = por %p349, %p350
      %s352 = ssub.s32 %s24, %s31
      %p353 = scmp.eq.s32.totalorder %s352, 0
      %s355 = sadd.s32 %s354, 1
      %s356 = scalar_select %p353, %s354, %s355
      %p359 = pneg %p353
      %p360 = scmp.eq.s32.totalorder %s24, 1
      %p361 = por %p359, %p360
      %p362 = scmp.ne.s32.totalorder %s354, %s357
      %p363 = scmp.eq.s32.totalorder %s24, 0
      %p364 = por %p362, %p363
      %p365 = scmp.ne.s32.totalorder %s354, %s357
      %p366 = scmp.eq.s32.totalorder %s29, 1
      %p367 = por %p365, %p366
      %p368 = scmp.ne.s32.totalorder %s357, %s358
      %p369 = scmp.eq.s32.totalorder %s29, 0
      %p370 = por %p368, %p369
      %p371 = scmp.ne.s32.totalorder %s357, %s358
      %p372 = scmp.eq.s32.totalorder %s30, 1
      %p373 = por %p371, %p372
      %p375 = scmp.ne.s32.totalorder %s358, %s374
      %p376 = scmp.eq.s32.totalorder %s30, 0
      %p377 = por %p375, %p376
      %p378 = scmp.le.s32.totalorder 1, %s24
      %p379 = scmp.lt.s32.totalorder %s24, 3
      %p380 = pnand %p378, %p379
      %p381 = pneg %p380
      // Predicated region
      $region9: #{encoder_mha_forward.1} parent=5 // pred_check
        _
      $region10: #{encoder_mha_forward.1} parent=5 // pred_check_branch
        %383 = sbr.rel (%p380) target = $region12
      $region11: #{encoder_mha_forward.1} parent=5 // pred_region
        %s384 = ssub.s32 %s24, 1
        // Predicated region
        $region13: #{encoder_mha_forward.1} parent=11 // pred_check
          %p385 = pneg %p71
        $region14: #{encoder_mha_forward.1} parent=11 // pred_check_branch
          %387 = sbr.rel (%p385) target = $region16
        $region15: #{encoder_mha_forward.1} parent=11 // pred_region
          _
        $region16: #{encoder_mha_forward.1} parent=11 // pred_fallthru
          _
        // Predicated region
        $region17: #{encoder_mha_forward.1} parent=11 // pred_check
          %p388 = pneg %p92
        $region18: #{encoder_mha_forward.1} parent=11 // pred_check_branch
          %390 = sbr.rel (%p388) target = $region20
        $region19: #{encoder_mha_forward.1} parent=11 // pred_region
          _
        $region20: #{encoder_mha_forward.1} parent=11 // pred_fallthru
          _
        // Predicated region
        $region21: #{encoder_mha_forward.1} parent=11 // pred_check
          %p391 = pneg %p113
        $region22: #{encoder_mha_forward.1} parent=11 // pred_check_branch
          %393 = sbr.rel (%p391) target = $region24
        $region23: #{encoder_mha_forward.1} parent=11 // pred_region
          _
        $region24: #{encoder_mha_forward.1} parent=11 // pred_fallthru
          _
        // Predicated region
        $region25: #{encoder_mha_forward.1} parent=11 // pred_check
          %p394 = pneg %p134
        $region26: #{encoder_mha_forward.1} parent=11 // pred_check_branch
          %396 = sbr.rel (%p394) target = $region28
        $region27: #{encoder_mha_forward.1} parent=11 // pred_region
          _
        $region28: #{encoder_mha_forward.1} parent=11 // pred_fallthru
          _
        // Predicated region
        $region29: #{encoder_mha_forward.1} parent=11 // pred_check
          %p397 = pneg %p155
        $region30: #{encoder_mha_forward.1} parent=11 // pred_check_branch
          %399 = sbr.rel (%p397) target = $region32
        $region31: #{encoder_mha_forward.1} parent=11 // pred_region
          _
        $region32: #{encoder_mha_forward.1} parent=11 // pred_fallthru
          _
        // Predicated region
        $region33: #{encoder_mha_forward.1} parent=11 // pred_check
          %p400 = pneg %p176
        $region34: #{encoder_mha_forward.1} parent=11 // pred_check_branch
          %402 = sbr.rel (%p400) target = $region36
        $region35: #{encoder_mha_forward.1} parent=11 // pred_region
          _
        $region36: #{encoder_mha_forward.1} parent=11 // pred_fallthru
          _
        // Predicated region
        $region37: #{encoder_mha_forward.1} parent=11 // pred_check
          %p403 = pneg %p197
        $region38: #{encoder_mha_forward.1} parent=11 // pred_check_branch
          %405 = sbr.rel (%p403) target = $region40
        $region39: #{encoder_mha_forward.1} parent=11 // pred_region
          _
        $region40: #{encoder_mha_forward.1} parent=11 // pred_fallthru
          _
        // Predicated region
        $region41: #{encoder_mha_forward.1} parent=11 // pred_check
          %p406 = pneg %p218
        $region42: #{encoder_mha_forward.1} parent=11 // pred_check_branch
          %408 = sbr.rel (%p406) target = $region44
        $region43: #{encoder_mha_forward.1} parent=11 // pred_region
          _
        $region44: #{encoder_mha_forward.1} parent=11 // pred_fallthru
          _
        // Predicated region
        $region45: #{encoder_mha_forward.1} parent=11 // pred_check
          %p409 = pneg %p239
        $region46: #{encoder_mha_forward.1} parent=11 // pred_check_branch
          %411 = sbr.rel (%p409) target = $region48
        $region47: #{encoder_mha_forward.1} parent=11 // pred_region
          _
        $region48: #{encoder_mha_forward.1} parent=11 // pred_fallthru
          _
        // Predicated region
        $region49: #{encoder_mha_forward.1} parent=11 // pred_check
          %p412 = pneg %p260
        $region50: #{encoder_mha_forward.1} parent=11 // pred_check_branch
          %414 = sbr.rel (%p412) target = $region52
        $region51: #{encoder_mha_forward.1} parent=11 // pred_region
          _
        $region52: #{encoder_mha_forward.1} parent=11 // pred_fallthru
          _
        // Predicated region
        $region53: #{encoder_mha_forward.1} parent=11 // pred_check
          %p415 = pneg %p281
        $region54: #{encoder_mha_forward.1} parent=11 // pred_check_branch
          %417 = sbr.rel (%p415) target = $region56
        $region55: #{encoder_mha_forward.1} parent=11 // pred_region
          _
        $region56: #{encoder_mha_forward.1} parent=11 // pred_fallthru
          _
        // Predicated region
        $region57: #{encoder_mha_forward.1} parent=11 // pred_check
          %p418 = pneg %p302
        $region58: #{encoder_mha_forward.1} parent=11 // pred_check_branch
          %420 = sbr.rel (%p418) target = $region60
        $region59: #{encoder_mha_forward.1} parent=11 // pred_region
          _
        $region60: #{encoder_mha_forward.1} parent=11 // pred_fallthru
          _
        // Predicated region
        $region61: #{encoder_mha_forward.1} parent=11 // pred_check
          %p421 = pneg %p323
        $region62: #{encoder_mha_forward.1} parent=11 // pred_check_branch
          %423 = sbr.rel (%p421) target = $region64
        $region63: #{encoder_mha_forward.1} parent=11 // pred_region
          _
        $region64: #{encoder_mha_forward.1} parent=11 // pred_fallthru
          _
        // Predicated region
        $region65: #{encoder_mha_forward.1} parent=11 // pred_check
          %p424 = pneg %p344
        $region66: #{encoder_mha_forward.1} parent=11 // pred_check_branch
          %426 = sbr.rel (%p424) target = $region68
        $region67: #{encoder_mha_forward.1} parent=11 // pred_region
          _
        $region68: #{encoder_mha_forward.1} parent=11 // pred_fallthru
          _
      $region12: #{encoder_mha_forward.1} parent=5 // pred_fallthru
        _
      %p427 = scmp.lt.s32.totalorder %s24, 2
      // Predicated region
      $region69: #{encoder_mha_forward.1} parent=5 // pred_check
        %p428 = pneg %p427
      $region70: #{encoder_mha_forward.1} parent=5 // pred_check_branch
        %430 = sbr.rel (%p428) target = $region72
      $region71: #{encoder_mha_forward.1} parent=5 // pred_region
        // Predicated region
        $region73: #{encoder_mha_forward.1} parent=71 // pred_check
          %p431 = pneg %p44
        $region74: #{encoder_mha_forward.1} parent=71 // pred_check_branch
          %433 = sbr.rel (%p431) target = $region76
        $region75: #{encoder_mha_forward.1} parent=71 // pred_region
          %p434 = scmp.lt.s32.totalorder %s24, 1
          %s435 = scalar_select %p434, %s24, 1
          %s436 = smul.addr %s435, 8
          %s437 = scalar_lea.vmem %s0, %s436
        $region76: #{encoder_mha_forward.1} parent=71 // pred_fallthru
          _
      $region72: #{encoder_mha_forward.1} parent=5 // pred_fallthru
        _
      %p438 = scmp.le.s32.totalorder 1, %s24
      %p439 = scmp.lt.s32.totalorder %s24, 3
      %p440 = pnand %p438, %p439
      %p441 = pneg %p440
      // Predicated region
      $region77: #{encoder_mha_forward.1} parent=5 // pred_check
        _
      $region78: #{encoder_mha_forward.1} parent=5 // pred_check_branch
        %443 = sbr.rel (%p440) target = $region80
      $region79: #{encoder_mha_forward.1} parent=5 // pred_region
        %s444 = ssub.s32 %s24, 1
        %p445 = scmp.lt.s32.totalorder %s29, 1
        %s446 = scalar_select %p445, %s29, 1
        %s447 = smul.addr %s446, 8
        %s448 = scalar_lea.vmem %s0, %s447
        %p449 = pneg %p50
        %p450 = pneg %p47
        %p451 = pneg %p71
        %p452 = pneg %p68
        %p453 = pneg %p92
        %p454 = pneg %p89
        %p455 = pneg %p113
        %p456 = pneg %p110
        %p457 = pneg %p134
        %p458 = pneg %p131
        %p459 = pneg %p155
        %p460 = pneg %p152
        %p461 = pneg %p176
        %p462 = pneg %p173
        %p463 = pneg %p197
        %p464 = pneg %p194
        %p465 = pneg %p218
        %p466 = pneg %p215
        %p467 = pneg %p239
        %p468 = pneg %p236
        %p469 = pneg %p260
        %p470 = pneg %p257
        %p471 = pneg %p281
        %p472 = pneg %p278
        %p473 = pneg %p302
        %p474 = pneg %p299
        %p475 = pneg %p323
        %p476 = pneg %p320
        %p477 = pneg %p344
        %p478 = pneg %p341
        %p479 = pneg %p370
        %p480 = pneg %p367
        %s481 = sand.u32 %s357, 1
        %s482 = scalar_lea.sflag [#allocation3], %s481
        %s483 = sand.u32 %s357, 1
        %s484 = smul.addr %s483, 8
        %s485 = scalar_lea.vmem [#allocation2], %s484
        %p486 = scmp.lt.s32.totalorder %s29, 1
        %s487 = scalar_select %p486, %s29, 1
        %s488 = smul.addr %s487, 8
        %s489 = scalar_lea.vmem %s0, %s488
        %v490 = vld [vmem:[%s489] sm:$0xff]
        %v491 = vld [vmem:[%s1] sm:$0xf]
        %v492 = vld [vmem:[%s2] sm:$0x1]
        %v494 = vperm.slane %v492, 0
        %vm496 = vcmask 31744
        %v498 = vsel %vm496, %v490, 0
        %vm500 = vcmask 1043456
        %v502 = vsel %vm500, %v491, 0
        %504 = vmatpush.msra.mxu0 0.0
        %505 = vmatpush.msra.mxu0 0.0
        %506 = vmatpush.msra.mxu0 0.0
        %507 = vmatpush.msra.mxu0 0.0
        %508 = vmatpush.msra.mxu0 0.0
        %509 = vmatpush.msra.mxu0 0.0
        %510 = vmatpush.msra.mxu0 0.0
        %511 = vmatpush.msra.mxu0 0.0
        %512 = vmatpush.msra.mxu0 0.0
        %513 = vmatpush.msra.mxu0 0.0
        %514 = vmatpush.msra.mxu0 0.0
        %515 = vmatpush.msra.mxu0 0.0
        %516 = vmatpush.msra.mxu0 0.0
        %517 = vmatpush.msra.mxu0 0.0
        %518 = vmatpush.msra.mxu0 0.0
        %519 = vmatpush.msra.mxu0 %v502
        %520 = vmatmul.f32.gmra.mxu0 %v498
        %v521 = vpop.f32.mrf.mxu0
        %v522 = vadd.f32 %v494, %v521
        %523 = vdwg.mxu0
        %v524 = vld [vmem:[%s3] sm:$0x1]
        %v525 = vld [vmem:[%s4] sm:$0x1]
        %vm526 = vcmask 261120
        %v527 = vsel %vm526, %v522, 0.0
        %528 = vadd.xlane.f32.xlu0 %v527
        %v529 = vpop.xlane.xlu0 %528
        %v530 = vrcp.pop 32.0
        %v531 = vmul.f32 32.0, %v530
        %v532 = vsub.f32 1.0, %v531
        %v533 = vmul.f32 %v530, %v532
        %v534 = vadd.f32 %v530, %v533
        %vm535 = vweird.f32 %v530
        %v536 = vsel %vm535, %v530, %v534
        %v537 = vmul.f32 %v529, %v536
        %v538 = vsub.f32 %v522, %v537
        %v539 = vmul.f32 %v538, %v538
        %v540 = vsel %vm526, %v539, 0.0
        %541 = vadd.xlane.f32.xlu0 %v540
        %v542 = vpop.xlane.xlu0 %541
        %v543 = vmul.f32 %v542, %v536
        %v544 = vadd.f32 %v543, 1e-05
        %v545 = vrsqrt.pop %v544
        %v546 = vmul.f32 %v545, %v544
        %v547 = vmul.f32 %v546, %v545
        %v548 = vmul.f32 0.5, %v547
        %v549 = vsub.f32 1.5, %v548
        %v550 = vmul.f32 %v545, %v549
        %vm551 = vweird.f32 %v544
        %vm552 = vweird.f32 %v545
        %vm553 = vmor %vm551, %vm552
        %v554 = vsel %vm553, %v545, %v550
        %v555 = vmul.f32 %v538, %v554
        %v557 = vperm.slane %v524, 0
        %v559 = vmul.f32 %v555, %v557
        %v561 = vperm.slane %v525, 0
        %v563 = vadd.f32 %v559, %v561
        %v564 = vld [vmem:[%s5] sm:$0xff]
        %v565 = vld [vmem:[%s5 + $0x8] sm:$0xff]
        %v566 = vld [vmem:[%s5 + $0x10] sm:$0xff]
        %v567 = vld [vmem:[%s5 + $0x18] sm:$0xff]
        %v569 = vsel %vm526, %v563, 0
        %571 = vmatpush.msra.mxu0 0.0
        %572 = vmatpush.msra.mxu0 0.0
        %573 = vmatpush.msra.mxu0 0.0
        %574 = vmatpush.msra.mxu0 0.0
        %575 = vmatpush.msra.mxu0 0.0
        %576 = vmatpush.msra.mxu0 0.0
        %577 = vmatpush.msra.mxu0 0.0
        %578 = vmatpush.msra.mxu0 0.0
        %579 = vmatpush.msra.mxu0 0.0
        %580 = vmatpush.msra.mxu0 0.0
        %581 = vmatpush.msra.mxu0 0.0
        %582 = vmatpush.msra.mxu0 0.0
        %583 = vmatpush.msra.mxu0 %v567
        %584 = vmatpush.msra.mxu0 %v566
        %585 = vmatpush.msra.mxu0 %v565
        %586 = vmatpush.msra.mxu0 %v564
        %587 = vmatmul.f32.gmra.mxu0 %v569
        %v588 = vpop.f32.mrf.mxu0
        %v589 = vadd.f32 0.0, %v588
        %590 = vdwg.mxu0
        %v591 = vld [vmem:[%s6] sm:$0xff]
        %v592 = vld [vmem:[%s6 + $0x8] sm:$0xff]
        %v593 = vld [vmem:[%s6 + $0x10] sm:$0xff]
        %v594 = vld [vmem:[%s6 + $0x18] sm:$0xff]
        %595 = vmatpush.msra.mxu0 0.0
        %596 = vmatpush.msra.mxu0 0.0
        %597 = vmatpush.msra.mxu0 0.0
        %598 = vmatpush.msra.mxu0 0.0
        %599 = vmatpush.msra.mxu0 0.0
        %600 = vmatpush.msra.mxu0 0.0
        %601 = vmatpush.msra.mxu0 0.0
        %602 = vmatpush.msra.mxu0 0.0
        %603 = vmatpush.msra.mxu0 0.0
        %604 = vmatpush.msra.mxu0 0.0
        %605 = vmatpush.msra.mxu0 0.0
        %606 = vmatpush.msra.mxu0 0.0
        %607 = vmatpush.msra.mxu0 %v594
        %608 = vmatpush.msra.mxu0 %v593
        %609 = vmatpush.msra.mxu0 %v592
        %610 = vmatpush.msra.mxu0 %v591
        %611 = vmatmul.f32.gmra.mxu0 %v569
        %v612 = vpop.f32.mrf.mxu0
        %v613 = vadd.f32 0.0, %v612
        %614 = vdwg.mxu0
        %v615 = vld [vmem:[%s7] sm:$0xff]
        %v616 = vld [vmem:[%s7 + $0x8] sm:$0xff]
        %v617 = vld [vmem:[%s7 + $0x10] sm:$0xff]
        %v618 = vld [vmem:[%s7 + $0x18] sm:$0xff]
        %619 = vmatpush.msra.mxu0 0.0
        %620 = vmatpush.msra.mxu0 0.0
        %621 = vmatpush.msra.mxu0 0.0
        %622 = vmatpush.msra.mxu0 0.0
        %623 = vmatpush.msra.mxu0 0.0
        %624 = vmatpush.msra.mxu0 0.0
        %625 = vmatpush.msra.mxu0 0.0
        %626 = vmatpush.msra.mxu0 0.0
        %627 = vmatpush.msra.mxu0 0.0
        %628 = vmatpush.msra.mxu0 0.0
        %629 = vmatpush.msra.mxu0 0.0
        %630 = vmatpush.msra.mxu0 0.0
        %631 = vmatpush.msra.mxu0 %v618
        %632 = vmatpush.msra.mxu0 %v617
        %633 = vmatpush.msra.mxu0 %v616
        %634 = vmatpush.msra.mxu0 %v615
        %635 = vmatmul.f32.gmra.mxu0 %v569
        %v636 = vpop.f32.mrf.mxu0
        %v637 = vadd.f32 0.0, %v636
        %638 = vdwg.mxu0
        %vm639 = vcmask 130048
        %v641 = vsel %vm639, %v589, 0
        %v644 = vsel %vm639, %v613, 0
        %646 = vmatpush.xpose.msra.mxu0 0.0
        %647 = vmatpush.xpose.msra.mxu0 0.0
        %648 = vmatpush.xpose.msra.mxu0 0.0
        %649 = vmatpush.xpose.msra.mxu0 0.0
        %650 = vmatpush.xpose.msra.mxu0 0.0
        %651 = vmatpush.xpose.msra.mxu0 0.0
        %652 = vmatpush.xpose.msra.mxu0 0.0
        %653 = vmatpush.xpose.msra.mxu0 0.0
        %654 = vmatpush.xpose.msra.mxu0 0.0
        %655 = vmatpush.xpose.msra.mxu0 0.0
        %656 = vmatpush.xpose.msra.mxu0 0.0
        %657 = vmatpush.xpose.msra.mxu0 0.0
        %658 = vmatpush.xpose.msra.mxu0 0.0
        %659 = vmatpush.xpose.msra.mxu0 0.0
        %660 = vmatpush.xpose.msra.mxu0 0.0
        %661 = vmatpush.xpose.msra.mxu0 %v644
        %662 = vmatmul.f32.gmra.mxu0 %v641
        %v663 = vpop.f32.mrf.mxu0
        %v664 = vadd.f32 0.0, %v663
        %665 = vdwg.mxu0
        %v666 = vmul.f32 %v664, 0.25
        %vm667 = vcmask 64512
        %v668 = vsel %vm667, %v666, -inf
        %669 = vmax.xlane.f32.xlu0 %v668
        %v670 = vpop.xlane.xlu0 %669
        %v671 = vsub.f32 %v666, %v670
        %v672 = vmul.f32 %v671, 1.442695
        %v673 = vpow.pop %v672
        %v674 = vsel %vm667, %v673, 0.0
        %675 = vadd.xlane.f32.xlu0 %v674
        %v676 = vpop.xlane.xlu0 %675
        %v677 = vrcp.pop %v676
        %v678 = vmul.f32 %v676, %v677
        %v679 = vsub.f32 1.0, %v678
        %v680 = vmul.f32 %v677, %v679
        %v681 = vadd.f32 %v677, %v680
        %vm682 = vweird.f32 %v676
        %vm683 = vweird.f32 %v677
        %vm684 = vmor %vm682, %vm683
        %v685 = vsel %vm684, %v677, %v681
        %v686 = vand.u32 2147483647, %v676
        %vm687 = vcmp.eq.f32.partialorder %v686, 8.507059e+37
        %v688 = vand.u32 %v676, 2147483648
        %v689 = vor.u32 1.1754944e-38, %v688
        %v690 = vsel %vm687, %v689, %v685
        %v691 = vmul.f32 %v673, %v690
        %v693 = vsel %vm667, %v691, 0
        %695 = vmatpush.msra.mxu0 0.0
        %696 = vmatpush.msra.mxu0 0.0
        %697 = vmatpush.msra.mxu0 0.0
        %698 = vmatpush.msra.mxu0 0.0
        %699 = vmatpush.msra.mxu0 0.0
        %700 = vmatpush.msra.mxu0 0.0
        %701 = vmatpush.msra.mxu0 0.0
        %702 = vmatpush.msra.mxu0 0.0
        %703 = vmatpush.msra.mxu0 0.0
        %704 = vmatpush.msra.mxu0 0.0
        %705 = vmatpush.msra.mxu0 0.0
        %706 = vmatpush.msra.mxu0 0.0
        %707 = vmatpush.msra.mxu0 0.0
        %708 = vmatpush.msra.mxu0 0.0
        %709 = vmatpush.msra.mxu0 0.0
        %710 = vmatpush.msra.mxu0 %v637
        %711 = vmatmul.f32.gmra.mxu0 %v693
        %v712 = vpop.f32.mrf.mxu0
        %v713 = vadd.f32 0.0, %v712
        %714 = vdwg.mxu0
        %v715 = vld [vmem:[%s8] sm:$0xff]
        %v716 = vld [vmem:[%s8 + $0x8] sm:$0xff]
        %s717 = scalar_lea.vmem %s5, 32
        %v718 = vld [vmem:[%s717] sm:$0xff]
        %v719 = vld [vmem:[%s717 + $0x8] sm:$0xff]
        %v720 = vld [vmem:[%s717 + $0x10] sm:$0xff]
        %v721 = vld [vmem:[%s717 + $0x18] sm:$0xff]
        %722 = vmatpush.msra.mxu0 0.0
        %723 = vmatpush.msra.mxu0 0.0
        %724 = vmatpush.msra.mxu0 0.0
        %725 = vmatpush.msra.mxu0 0.0
        %726 = vmatpush.msra.mxu0 0.0
        %727 = vmatpush.msra.mxu0 0.0
        %728 = vmatpush.msra.mxu0 0.0
        %729 = vmatpush.msra.mxu0 0.0
        %730 = vmatpush.msra.mxu0 0.0
        %731 = vmatpush.msra.mxu0 0.0
        %732 = vmatpush.msra.mxu0 0.0
        %733 = vmatpush.msra.mxu0 0.0
        %734 = vmatpush.msra.mxu0 %v721
        %735 = vmatpush.msra.mxu0 %v720
        %736 = vmatpush.msra.mxu0 %v719
        %737 = vmatpush.msra.mxu0 %v718
        %738 = vmatmul.f32.gmra.mxu0 %v569
        %v739 = vpop.f32.mrf.mxu0
        %v740 = vadd.f32 0.0, %v739
        %741 = vdwg.mxu0
        %s742 = scalar_lea.vmem %s6, 32
        %v743 = vld [vmem:[%s742] sm:$0xff]
        %v744 = vld [vmem:[%s742 + $0x8] sm:$0xff]
        %v745 = vld [vmem:[%s742 + $0x10] sm:$0xff]
        %v746 = vld [vmem:[%s742 + $0x18] sm:$0xff]
        %747 = vmatpush.msra.mxu0 0.0
        %748 = vmatpush.msra.mxu0 0.0
        %749 = vmatpush.msra.mxu0 0.0
        %750 = vmatpush.msra.mxu0 0.0
        %751 = vmatpush.msra.mxu0 0.0
        %752 = vmatpush.msra.mxu0 0.0
        %753 = vmatpush.msra.mxu0 0.0
        %754 = vmatpush.msra.mxu0 0.0
        %755 = vmatpush.msra.mxu0 0.0
        %756 = vmatpush.msra.mxu0 0.0
        %757 = vmatpush.msra.mxu0 0.0
        %758 = vmatpush.msra.mxu0 0.0
        %759 = vmatpush.msra.mxu0 %v746
        %760 = vmatpush.msra.mxu0 %v745
        %761 = vmatpush.msra.mxu0 %v744
        %762 = vmatpush.msra.mxu0 %v743
        %763 = vmatmul.f32.gmra.mxu0 %v569
        %v764 = vpop.f32.mrf.mxu0
        %v765 = vadd.f32 0.0, %v764
        %766 = vdwg.mxu0
        %s767 = scalar_lea.vmem %s7, 32
        %v768 = vld [vmem:[%s767] sm:$0xff]
        %v769 = vld [vmem:[%s767 + $0x8] sm:$0xff]
        %v770 = vld [vmem:[%s767 + $0x10] sm:$0xff]
        %v771 = vld [vmem:[%s767 + $0x18] sm:$0xff]
        %772 = vmatpush.msra.mxu0 0.0
        %773 = vmatpush.msra.mxu0 0.0
        %774 = vmatpush.msra.mxu0 0.0
        %775 = vmatpush.msra.mxu0 0.0
        %776 = vmatpush.msra.mxu0 0.0
        %777 = vmatpush.msra.mxu0 0.0
        %778 = vmatpush.msra.mxu0 0.0
        %779 = vmatpush.msra.mxu0 0.0
        %780 = vmatpush.msra.mxu0 0.0
        %781 = vmatpush.msra.mxu0 0.0
        %782 = vmatpush.msra.mxu0 0.0
        %783 = vmatpush.msra.mxu0 0.0
        %784 = vmatpush.msra.mxu0 %v771
        %785 = vmatpush.msra.mxu0 %v770
        %786 = vmatpush.msra.mxu0 %v769
        %787 = vmatpush.msra.mxu0 %v768
        %788 = vmatmul.f32.gmra.mxu0 %v569
        %v789 = vpop.f32.mrf.mxu0
        %v790 = vadd.f32 0.0, %v789
        %791 = vdwg.mxu0
        %v793 = vsel %vm639, %v740, 0
        %v796 = vsel %vm639, %v765, 0
        %798 = vmatpush.xpose.msra.mxu0 0.0
        %799 = vmatpush.xpose.msra.mxu0 0.0
        %800 = vmatpush.xpose.msra.mxu0 0.0
        %801 = vmatpush.xpose.msra.mxu0 0.0
        %802 = vmatpush.xpose.msra.mxu0 0.0
        %803 = vmatpush.xpose.msra.mxu0 0.0
        %804 = vmatpush.xpose.msra.mxu0 0.0
        %805 = vmatpush.xpose.msra.mxu0 0.0
        %806 = vmatpush.xpose.msra.mxu0 0.0
        %807 = vmatpush.xpose.msra.mxu0 0.0
        %808 = vmatpush.xpose.msra.mxu0 0.0
        %809 = vmatpush.xpose.msra.mxu0 0.0
        %810 = vmatpush.xpose.msra.mxu0 0.0
        %811 = vmatpush.xpose.msra.mxu0 0.0
        %812 = vmatpush.xpose.msra.mxu0 0.0
        %813 = vmatpush.xpose.msra.mxu0 %v796
        %814 = vmatmul.f32.gmra.mxu0 %v793
        %v815 = vpop.f32.mrf.mxu0
        %v816 = vadd.f32 0.0, %v815
        %817 = vdwg.mxu0
        %v818 = vmul.f32 %v816, 0.25
        %v819 = vsel %vm667, %v818, -inf
        %820 = vmax.xlane.f32.xlu0 %v819
        %v821 = vpop.xlane.xlu0 %820
        %v822 = vsub.f32 %v818, %v821
        %v823 = vmul.f32 %v822, 1.442695
        %v824 = vpow.pop %v823
        %v825 = vsel %vm667, %v824, 0.0
        %826 = vadd.xlane.f32.xlu0 %v825
        %v827 = vpop.xlane.xlu0 %826
        %v828 = vrcp.pop %v827
        %v829 = vmul.f32 %v827, %v828
        %v830 = vsub.f32 1.0, %v829
        %v831 = vmul.f32 %v828, %v830
        %v832 = vadd.f32 %v828, %v831
        %vm833 = vweird.f32 %v827
        %vm834 = vweird.f32 %v828
        %vm835 = vmor %vm833, %vm834
        %v836 = vsel %vm835, %v828, %v832
        %v837 = vand.u32 2147483647, %v827
        %vm838 = vcmp.eq.f32.partialorder %v837, 8.507059e+37
        %v839 = vand.u32 %v827, 2147483648
        %v840 = vor.u32 1.1754944e-38, %v839
        %v841 = vsel %vm838, %v840, %v836
        %v842 = vmul.f32 %v824, %v841
        %v844 = vsel %vm667, %v842, 0
        %846 = vmatpush.msra.mxu0 0.0
        %847 = vmatpush.msra.mxu0 0.0
        %848 = vmatpush.msra.mxu0 0.0
        %849 = vmatpush.msra.mxu0 0.0
        %850 = vmatpush.msra.mxu0 0.0
        %851 = vmatpush.msra.mxu0 0.0
        %852 = vmatpush.msra.mxu0 0.0
        %853 = vmatpush.msra.mxu0 0.0
        %854 = vmatpush.msra.mxu0 0.0
        %855 = vmatpush.msra.mxu0 0.0
        %856 = vmatpush.msra.mxu0 0.0
        %857 = vmatpush.msra.mxu0 0.0
        %858 = vmatpush.msra.mxu0 0.0
        %859 = vmatpush.msra.mxu0 0.0
        %860 = vmatpush.msra.mxu0 0.0
        %861 = vmatpush.msra.mxu0 %v790
        %862 = vmatmul.f32.gmra.mxu0 %v844
        %v863 = vpop.f32.mrf.mxu0
        %v864 = vadd.f32 0.0, %v863
        %865 = vdwg.mxu0
        %s866 = scalar_lea.vmem %s8, 16
        %v867 = vld [vmem:[%s866] sm:$0xff]
        %v868 = vld [vmem:[%s866 + $0x8] sm:$0xff]
        %v870 = vsel %vm639, %v864, 0
        %872 = vmatpush.msra.mxu0 0.0
        %873 = vmatpush.msra.mxu0 0.0
        %874 = vmatpush.msra.mxu0 0.0
        %875 = vmatpush.msra.mxu0 0.0
        %876 = vmatpush.msra.mxu0 0.0
        %877 = vmatpush.msra.mxu0 0.0
        %878 = vmatpush.msra.mxu0 0.0
        %879 = vmatpush.msra.mxu0 0.0
        %880 = vmatpush.msra.mxu0 0.0
        %881 = vmatpush.msra.mxu0 0.0
        %882 = vmatpush.msra.mxu0 0.0
        %883 = vmatpush.msra.mxu0 0.0
        %884 = vmatpush.msra.mxu0 0.0
        %885 = vmatpush.msra.mxu0 0.0
        %886 = vmatpush.msra.mxu0 %v868
        %887 = vmatpush.msra.mxu0 %v867
        %888 = vmatmul.f32.gmra.mxu0 %v870
        %v889 = vpop.f32.mrf.mxu0
        %v890 = vadd.f32 0.0, %v889
        %891 = vdwg.mxu0
        %v893 = vsel %vm639, %v713, 0
        %895 = vmatpush.msra.mxu0 0.0
        %896 = vmatpush.msra.mxu0 0.0
        %897 = vmatpush.msra.mxu0 0.0
        %898 = vmatpush.msra.mxu0 0.0
        %899 = vmatpush.msra.mxu0 0.0
        %900 = vmatpush.msra.mxu0 0.0
        %901 = vmatpush.msra.mxu0 0.0
        %902 = vmatpush.msra.mxu0 0.0
        %903 = vmatpush.msra.mxu0 0.0
        %904 = vmatpush.msra.mxu0 0.0
        %905 = vmatpush.msra.mxu0 0.0
        %906 = vmatpush.msra.mxu0 0.0
        %907 = vmatpush.msra.mxu0 0.0
        %908 = vmatpush.msra.mxu0 0.0
        %909 = vmatpush.msra.mxu0 %v716
        %910 = vmatpush.msra.mxu0 %v715
        %911 = vmatmul.f32.gmra.mxu0 %v893
        %v912 = vpop.f32.mrf.mxu0
        %v913 = vadd.f32 %v890, %v912
        %914 = vdwg.mxu0
        %v915 = vadd.f32 %v913, %v522
        %v916 = vld [vmem:[%s9] sm:$0x1]
        %v917 = vld [vmem:[%s10] sm:$0x1]
        %v918 = vsel %vm526, %v915, 0.0
        %919 = vadd.xlane.f32.xlu0 %v918
        %v920 = vpop.xlane.xlu0 %919
        %v921 = vmul.f32 %v920, %v536
        %v922 = vsub.f32 %v915, %v921
        %v923 = vmul.f32 %v922, %v922
        %v924 = vsel %vm526, %v923, 0.0
        %925 = vadd.xlane.f32.xlu0 %v924
        %v926 = vpop.xlane.xlu0 %925
        %v927 = vmul.f32 %v926, %v536
        %v928 = vadd.f32 %v927, 1e-05
        %v929 = vrsqrt.pop %v928
        %v930 = vmul.f32 %v929, %v928
        %v931 = vmul.f32 %v930, %v929
        %v932 = vmul.f32 0.5, %v931
        %v933 = vsub.f32 1.5, %v932
        %v934 = vmul.f32 %v929, %v933
        %vm935 = vweird.f32 %v928
        %vm936 = vweird.f32 %v929
        %vm937 = vmor %vm935, %vm936
        %v938 = vsel %vm937, %v929, %v934
        %v939 = vmul.f32 %v922, %v938
        %v941 = vperm.slane %v916, 0
        %v943 = vmul.f32 %v939, %v941
        %v945 = vperm.slane %v917, 0
        %v947 = vadd.f32 %v943, %v945
        %v948 = vld [vmem:[%s11] sm:$0xff]
        %v949 = vld [vmem:[%s11 + $0x8] sm:$0xff]
        %v950 = vld [vmem:[%s11 + $0x10] sm:$0xff]
        %v951 = vld [vmem:[%s11 + $0x18] sm:$0xff]
        %v952 = vld [vmem:[%s11 + $0x20] sm:$0xff]
        %v953 = vld [vmem:[%s11 + $0x28] sm:$0xff]
        %v954 = vld [vmem:[%s11 + $0x30] sm:$0xff]
        %v955 = vld [vmem:[%s11 + $0x38] sm:$0xff]
        %v956 = vld [vmem:[%s11 + $0x40] sm:$0xff]
        %v957 = vld [vmem:[%s11 + $0x48] sm:$0xff]
        %v958 = vld [vmem:[%s11 + $0x50] sm:$0xff]
        %v959 = vld [vmem:[%s11 + $0x58] sm:$0xff]
        %v960 = vld [vmem:[%s11 + $0x60] sm:$0xff]
        %v961 = vld [vmem:[%s11 + $0x68] sm:$0xff]
        %v962 = vld [vmem:[%s11 + $0x70] sm:$0xff]
        %v963 = vld [vmem:[%s11 + $0x78] sm:$0xff]
        %v964 = vld [vmem:[%s12] sm:$0xf]
        %v966 = vperm.slane %v964, 0
        %v967 = vperm.slane %v964, 1
        %v968 = vperm.slane %v964, 2
        %v969 = vperm.slane %v964, 3
        %v975 = vsel %vm526, %v947, 0
        %977 = vmatpush.msra.mxu0 0.0
        %978 = vmatpush.msra.mxu0 0.0
        %979 = vmatpush.msra.mxu0 0.0
        %980 = vmatpush.msra.mxu0 0.0
        %981 = vmatpush.msra.mxu0 0.0
        %982 = vmatpush.msra.mxu0 0.0
        %983 = vmatpush.msra.mxu0 0.0
        %984 = vmatpush.msra.mxu0 0.0
        %985 = vmatpush.msra.mxu0 0.0
        %986 = vmatpush.msra.mxu0 0.0
        %987 = vmatpush.msra.mxu0 0.0
        %988 = vmatpush.msra.mxu0 0.0
        %989 = vmatpush.msra.mxu0 %v960
        %990 = vmatpush.msra.mxu0 %v956
        %991 = vmatpush.msra.mxu0 %v952
        %992 = vmatpush.msra.mxu0 %v948
        %993 = vmatmul.f32.gmra.mxu0 %v975
        %v994 = vpop.f32.mrf.mxu0
        %v995 = vadd.f32 %v966, %v994
        %996 = vdwg.mxu0
        %997 = vmatpush.msra.mxu0 0.0
        %998 = vmatpush.msra.mxu0 0.0
        %999 = vmatpush.msra.mxu0 0.0
        %1000 = vmatpush.msra.mxu0 0.0
        %1001 = vmatpush.msra.mxu0 0.0
        %1002 = vmatpush.msra.mxu0 0.0
        %1003 = vmatpush.msra.mxu0 0.0
        %1004 = vmatpush.msra.mxu0 0.0
        %1005 = vmatpush.msra.mxu0 0.0
        %1006 = vmatpush.msra.mxu0 0.0
        %1007 = vmatpush.msra.mxu0 0.0
        %1008 = vmatpush.msra.mxu0 0.0
        %1009 = vmatpush.msra.mxu0 %v961
        %1010 = vmatpush.msra.mxu0 %v957
        %1011 = vmatpush.msra.mxu0 %v953
        %1012 = vmatpush.msra.mxu0 %v949
        %1013 = vmatmul.f32.gmra.mxu0 %v975
        %v1014 = vpop.f32.mrf.mxu0
        %v1015 = vadd.f32 %v967, %v1014
        %1016 = vdwg.mxu0
        %1017 = vmatpush.msra.mxu0 0.0
        %1018 = vmatpush.msra.mxu0 0.0
        %1019 = vmatpush.msra.mxu0 0.0
        %1020 = vmatpush.msra.mxu0 0.0
        %1021 = vmatpush.msra.mxu0 0.0
        %1022 = vmatpush.msra.mxu0 0.0
        %1023 = vmatpush.msra.mxu0 0.0
        %1024 = vmatpush.msra.mxu0 0.0
        %1025 = vmatpush.msra.mxu0 0.0
        %1026 = vmatpush.msra.mxu0 0.0
        %1027 = vmatpush.msra.mxu0 0.0
        %1028 = vmatpush.msra.mxu0 0.0
        %1029 = vmatpush.msra.mxu0 %v962
        %1030 = vmatpush.msra.mxu0 %v958
        %1031 = vmatpush.msra.mxu0 %v954
        %1032 = vmatpush.msra.mxu0 %v950
        %1033 = vmatmul.f32.gmra.mxu0 %v975
        %v1034 = vpop.f32.mrf.mxu0
        %v1035 = vadd.f32 %v968, %v1034
        %1036 = vdwg.mxu0
        %1037 = vmatpush.msra.mxu0 0.0
        %1038 = vmatpush.msra.mxu0 0.0
        %1039 = vmatpush.msra.mxu0 0.0
        %1040 = vmatpush.msra.mxu0 0.0
        %1041 = vmatpush.msra.mxu0 0.0
        %1042 = vmatpush.msra.mxu0 0.0
        %1043 = vmatpush.msra.mxu0 0.0
        %1044 = vmatpush.msra.mxu0 0.0
        %1045 = vmatpush.msra.mxu0 0.0
        %1046 = vmatpush.msra.mxu0 0.0
        %1047 = vmatpush.msra.mxu0 0.0
        %1048 = vmatpush.msra.mxu0 0.0
        %1049 = vmatpush.msra.mxu0 %v963
        %1050 = vmatpush.msra.mxu0 %v959
        %1051 = vmatpush.msra.mxu0 %v955
        %1052 = vmatpush.msra.mxu0 %v951
        %1053 = vmatmul.f32.gmra.mxu0 %v975
        %v1054 = vpop.f32.mrf.mxu0
        %v1055 = vadd.f32 %v969, %v1054
        %1056 = vdwg.mxu0
        %vm1057 = vcmp.gt.f32.partialorder %v995, 0.0
        %vm1058 = vcmp.gt.f32.partialorder %v1015, 0.0
        %vm1059 = vcmp.gt.f32.partialorder %v1035, 0.0
        %vm1060 = vcmp.gt.f32.partialorder %v1055, 0.0
        %v1061 = vmul.f32 %v995, 0.01
        %v1062 = vmul.f32 %v1015, 0.01
        %v1063 = vmul.f32 %v1035, 0.01
        %v1064 = vmul.f32 %v1055, 0.01
        %v1065 = vsel %vm1057, %v995, %v1061
        %v1066 = vsel %vm1058, %v1015, %v1062
        %v1067 = vsel %vm1059, %v1035, %v1063
        %v1068 = vsel %vm1060, %v1055, %v1064
        %v1069 = vld [vmem:[%s13] sm:$0xff]
        %v1070 = vld [vmem:[%s13 + $0x8] sm:$0xff]
        %v1071 = vld [vmem:[%s13 + $0x10] sm:$0xff]
        %v1072 = vld [vmem:[%s13 + $0x18] sm:$0xff]
        %v1073 = vld [vmem:[%s13 + $0x20] sm:$0xff]
        %v1074 = vld [vmem:[%s13 + $0x28] sm:$0xff]
        %v1075 = vld [vmem:[%s13 + $0x30] sm:$0xff]
        %v1076 = vld [vmem:[%s13 + $0x38] sm:$0xff]
        %v1077 = vld [vmem:[%s13 + $0x40] sm:$0xff]
        %v1078 = vld [vmem:[%s13 + $0x48] sm:$0xff]
        %v1079 = vld [vmem:[%s13 + $0x50] sm:$0xff]
        %v1080 = vld [vmem:[%s13 + $0x58] sm:$0xff]
        %v1081 = vld [vmem:[%s13 + $0x60] sm:$0xff]
        %v1082 = vld [vmem:[%s13 + $0x68] sm:$0xff]
        %v1083 = vld [vmem:[%s13 + $0x70] sm:$0xff]
        %v1084 = vld [vmem:[%s13 + $0x78] sm:$0xff]
        %v1085 = vld [vmem:[%s13 + $0x80] sm:$0xff]
        %v1086 = vld [vmem:[%s13 + $0x88] sm:$0xff]
        %v1087 = vld [vmem:[%s13 + $0x90] sm:$0xff]
        %v1088 = vld [vmem:[%s13 + $0x98] sm:$0xff]
        %v1089 = vld [vmem:[%s13 + $0xa0] sm:$0xff]
        %v1090 = vld [vmem:[%s13 + $0xa8] sm:$0xff]
        %v1091 = vld [vmem:[%s13 + $0xb0] sm:$0xff]
        %v1092 = vld [vmem:[%s13 + $0xb8] sm:$0xff]
        %v1093 = vld [vmem:[%s13 + $0xc0] sm:$0xff]
        %v1094 = vld [vmem:[%s13 + $0xc8] sm:$0xff]
        %v1095 = vld [vmem:[%s13 + $0xd0] sm:$0xff]
        %v1096 = vld [vmem:[%s13 + $0xd8] sm:$0xff]
        %v1097 = vld [vmem:[%s13 + $0xe0] sm:$0xff]
        %v1098 = vld [vmem:[%s13 + $0xe8] sm:$0xff]
        %v1099 = vld [vmem:[%s13 + $0xf0] sm:$0xff]
        %v1100 = vld [vmem:[%s13 + $0xf8] sm:$0xff]
        %v1101 = vld [vmem:[%s13 + $0x100] sm:$0xff]
        %v1102 = vld [vmem:[%s13 + $0x108] sm:$0xff]
        %v1103 = vld [vmem:[%s13 + $0x110] sm:$0xff]
        %v1104 = vld [vmem:[%s13 + $0x118] sm:$0xff]
        %v1105 = vld [vmem:[%s13 + $0x120] sm:$0xff]
        %v1106 = vld [vmem:[%s13 + $0x128] sm:$0xff]
        %v1107 = vld [vmem:[%s13 + $0x130] sm:$0xff]
        %v1108 = vld [vmem:[%s13 + $0x138] sm:$0xff]
        %v1109 = vld [vmem:[%s13 + $0x140] sm:$0xff]
        %v1110 = vld [vmem:[%s13 + $0x148] sm:$0xff]
        %v1111 = vld [vmem:[%s13 + $0x150] sm:$0xff]
        %v1112 = vld [vmem:[%s13 + $0x158] sm:$0xff]
        %v1113 = vld [vmem:[%s13 + $0x160] sm:$0xff]
        %v1114 = vld [vmem:[%s13 + $0x168] sm:$0xff]
        %v1115 = vld [vmem:[%s13 + $0x170] sm:$0xff]
        %v1116 = vld [vmem:[%s13 + $0x178] sm:$0xff]
        %v1117 = vld [vmem:[%s13 + $0x180] sm:$0xff]
        %v1118 = vld [vmem:[%s13 + $0x188] sm:$0xff]
        %v1119 = vld [vmem:[%s13 + $0x190] sm:$0xff]
        %v1120 = vld [vmem:[%s13 + $0x198] sm:$0xff]
        %v1121 = vld [vmem:[%s13 + $0x1a0] sm:$0xff]
        %v1122 = vld [vmem:[%s13 + $0x1a8] sm:$0xff]
        %v1123 = vld [vmem:[%s13 + $0x1b0] sm:$0xff]
        %v1124 = vld [vmem:[%s13 + $0x1b8] sm:$0xff]
        %v1125 = vld [vmem:[%s13 + $0x1c0] sm:$0xff]
        %v1126 = vld [vmem:[%s13 + $0x1c8] sm:$0xff]
        %v1127 = vld [vmem:[%s13 + $0x1d0] sm:$0xff]
        %v1128 = vld [vmem:[%s13 + $0x1d8] sm:$0xff]
        %v1129 = vld [vmem:[%s13 + $0x1e0] sm:$0xff]
        %v1130 = vld [vmem:[%s13 + $0x1e8] sm:$0xff]
        %v1131 = vld [vmem:[%s13 + $0x1f0] sm:$0xff]
        %v1132 = vld [vmem:[%s13 + $0x1f8] sm:$0xff]
        %v1133 = vld [vmem:[%s14] sm:$0x1]
        %v1135 = vperm.slane %v1133, 0
        %1137 = vmatpush.msra.mxu0 %v1084
        %1138 = vmatpush.msra.mxu0 %v1083
        %1139 = vmatpush.msra.mxu0 %v1082
        %1140 = vmatpush.msra.mxu0 %v1081
        %1141 = vmatpush.msra.mxu0 %v1080
        %1142 = vmatpush.msra.mxu0 %v1079
        %1143 = vmatpush.msra.mxu0 %v1078
        %1144 = vmatpush.msra.mxu0 %v1077
        %1145 = vmatpush.msra.mxu0 %v1076
        %1146 = vmatpush.msra.mxu0 %v1075
        %1147 = vmatpush.msra.mxu0 %v1074
        %1148 = vmatpush.msra.mxu0 %v1073
        %1149 = vmatpush.msra.mxu0 %v1072
        %1150 = vmatpush.msra.mxu0 %v1071
        %1151 = vmatpush.msra.mxu0 %v1070
        %1152 = vmatpush.msra.mxu0 %v1069
        %1153 = vmatmul.f32.gmra.mxu0 %v1065
        %v1154 = vpop.f32.mrf.mxu0
        %v1155 = vadd.f32 %v1135, %v1154
        %1156 = vdwg.mxu0
        %1157 = vmatpush.msra.mxu0 %v1100
        %1158 = vmatpush.msra.mxu0 %v1099
        %1159 = vmatpush.msra.mxu0 %v1098
        %1160 = vmatpush.msra.mxu0 %v1097
        %1161 = vmatpush.msra.mxu0 %v1096
        %1162 = vmatpush.msra.mxu0 %v1095
        %1163 = vmatpush.msra.mxu0 %v1094
        %1164 = vmatpush.msra.mxu0 %v1093
        %1165 = vmatpush.msra.mxu0 %v1092
        %1166 = vmatpush.msra.mxu0 %v1091
        %1167 = vmatpush.msra.mxu0 %v1090
        %1168 = vmatpush.msra.mxu0 %v1089
        %1169 = vmatpush.msra.mxu0 %v1088
        %1170 = vmatpush.msra.mxu0 %v1087
        %1171 = vmatpush.msra.mxu0 %v1086
        %1172 = vmatpush.msra.mxu0 %v1085
        %1173 = vmatmul.f32.gmra.mxu0 %v1066
        %v1174 = vpop.f32.mrf.mxu0
        %v1175 = vadd.f32 %v1155, %v1174
        %1176 = vdwg.mxu0
        %1177 = vmatpush.msra.mxu0 %v1116
        %1178 = vmatpush.msra.mxu0 %v1115
        %1179 = vmatpush.msra.mxu0 %v1114
        %1180 = vmatpush.msra.mxu0 %v1113
        %1181 = vmatpush.msra.mxu0 %v1112
        %1182 = vmatpush.msra.mxu0 %v1111
        %1183 = vmatpush.msra.mxu0 %v1110
        %1184 = vmatpush.msra.mxu0 %v1109
        %1185 = vmatpush.msra.mxu0 %v1108
        %1186 = vmatpush.msra.mxu0 %v1107
        %1187 = vmatpush.msra.mxu0 %v1106
        %1188 = vmatpush.msra.mxu0 %v1105
        %1189 = vmatpush.msra.mxu0 %v1104
        %1190 = vmatpush.msra.mxu0 %v1103
        %1191 = vmatpush.msra.mxu0 %v1102
        %1192 = vmatpush.msra.mxu0 %v1101
        %1193 = vmatmul.f32.gmra.mxu0 %v1067
        %v1194 = vpop.f32.mrf.mxu0
        %v1195 = vadd.f32 %v1175, %v1194
        %1196 = vdwg.mxu0
        %1197 = vmatpush.msra.mxu0 %v1132
        %1198 = vmatpush.msra.mxu0 %v1131
        %1199 = vmatpush.msra.mxu0 %v1130
        %1200 = vmatpush.msra.mxu0 %v1129
        %1201 = vmatpush.msra.mxu0 %v1128
        %1202 = vmatpush.msra.mxu0 %v1127
        %1203 = vmatpush.msra.mxu0 %v1126
        %1204 = vmatpush.msra.mxu0 %v1125
        %1205 = vmatpush.msra.mxu0 %v1124
        %1206 = vmatpush.msra.mxu0 %v1123
        %1207 = vmatpush.msra.mxu0 %v1122
        %1208 = vmatpush.msra.mxu0 %v1121
        %1209 = vmatpush.msra.mxu0 %v1120
        %1210 = vmatpush.msra.mxu0 %v1119
        %1211 = vmatpush.msra.mxu0 %v1118
        %1212 = vmatpush.msra.mxu0 %v1117
        %1213 = vmatmul.f32.gmra.mxu0 %v1068
        %v1214 = vpop.f32.mrf.mxu0
        %v1215 = vadd.f32 %v1195, %v1214
        %1216 = vdwg.mxu0
        %v1217 = vadd.f32 %v1215, %v915
        %1218 = vst.msk [vmem:[%s485] sm:$0xff] %vm526, %v1217
        %s1219 = sand.u32 %s357, 1
        %s1220 = scalar_lea.sflag [#allocation3], %s1219
        %s1221 = sand.u32 %s357, 1
        %s1222 = smul.addr %s1221, 8
        %s1223 = scalar_lea.vmem [#allocation2], %s1222
        // Predicated region
        $region81: #{encoder_mha_forward.1} parent=79 // pred_check
          %p1224 = pneg %p367
        $region82: #{encoder_mha_forward.1} parent=79 // pred_check_branch
          %1226 = sbr.rel (%p1224) target = $region84
        $region83: #{encoder_mha_forward.1} parent=79 // pred_region
          %1228 = vsyncadd %s1220, 0
          %s1229 = smul.addr %s29, 8
          %s1230 = scalar_lea.hbm %s15, %s1229
          %s1232 = sshll.u32 %s1223, 4
          %s1233 = int_to_ptr.vmem [resolvable:$true] %s1232
          %s1234 = sshll.u32 %s1230, 4
          %s1235 = int_to_ptr.hbm [resolvable:$true] %s1234
          %1237 = dma.vmem_to_hbm [thread:$0]  %s1233, 128, %s1235, %s1220
        $region84: #{encoder_mha_forward.1} parent=79 // pred_fallthru
          _
      $region80: #{encoder_mha_forward.1} parent=5 // pred_fallthru
        _
      %p1238 = scmp.le.s32.totalorder 2, %s24
      // Predicated region
      $region85: #{encoder_mha_forward.1} parent=5 // pred_check
        %p1239 = pneg %p1238
      $region86: #{encoder_mha_forward.1} parent=5 // pred_check_branch
        %1241 = sbr.rel (%p1239) target = $region88
      $region87: #{encoder_mha_forward.1} parent=5 // pred_region
        %s1242 = ssub.s32 %s24, 2
        // Predicated region
        $region89: #{encoder_mha_forward.1} parent=87 // pred_check
          %p1243 = pneg %p373
        $region90: #{encoder_mha_forward.1} parent=87 // pred_check_branch
          %1245 = sbr.rel (%p1243) target = $region92
        $region91: #{encoder_mha_forward.1} parent=87 // pred_region
          %s1246 = sand.u32 %s358, 1
          %s1247 = scalar_lea.sflag [#allocation3], %s1246
          %s1248 = sand.u32 %s358, 1
          %s1249 = smul.addr %s1248, 8
          %s1250 = scalar_lea.vmem [#allocation2], %s1249
          %1252 = dma.done %s1247, 128
        $region92: #{encoder_mha_forward.1} parent=87 // pred_fallthru
          _
      $region88: #{encoder_mha_forward.1} parent=5 // pred_fallthru
        _
    $region6: #{encoder_mha_forward.1} parent=1 // loop_footer
      %s28 = sadd.s32 1, %s24
    $region7: #{encoder_mha_forward.1} parent=1 // loop_footer_branch
      %23 = sbr.rel target = $region3
    $region8: #{encoder_mha_forward.1} parent=1 // loop_exit
      _
    %1253 = vsyncpa [#allocation3], 1
    %s1254 = scalar_lea.sflag [#allocation3], 1
    %1255 = vsyncpa %s1254, 1

</llo_original>
